<compile_context>
chip_gen: v7x
topology: tpu7x:2x2x1
jax: 0.10.0
libtpu: 0.0.40
codegen_flags: <defaults>
</compile_context>

<pallas_src>
import jax
import jax.numpy as jnp
from jax.experimental import pallas as pl
from jax.experimental.pallas import tpu as pltpu

H1 = 256
H2 = 128
NEG_SLOPE = 0.2


def _round_up(x, m):
    return ((x + m - 1) // m) * m


def _detect_generation():
    """Best-effort chip-generation detection; conservative fallback."""
    try:
        kind = jax.devices()[0].device_kind.lower()
    except Exception:
        return "other"
    if "v7" in kind:
        return "v7"
    if "v6" in kind:
        return "v6"
    if "v5" in kind:
        return "v5e"
    return "other"


# gen -> (batch-tile cap, layer-1 compute dtype, minimum grid tiles)
_GEN_CONFIG = {
    "v7":  (4096, jnp.bfloat16, 2),   # 64 MiB VMEM: cap tile; 2 TCs: >=2 tiles
    "v6":  (4096, jnp.bfloat16, 1),   # bf16 VPU available
    "v5e": (2048, jnp.float32, 1),    # 16 MiB scoped VMEM; no bf16 VPU
    "other": (2048, jnp.float32, 1),
}


def _leaky_relu(x):
    # max-form: mul + max (2 VPU ops/elem) instead of cmp+select+mul.
    return jnp.maximum(x, NEG_SLOPE * x)


def _disc_kernel(xT_ref, w1_ref, b1_ref, w2_ref, b2_ref, w3_ref, b3_ref, out_ref):
    # xT_ref : (data_dim, TM)  f32              -- batch on lanes
    # w1_ref : (H1, data_dim)  compute dtype    (PyTorch (out, in) layout)
    # b1_ref : (H1, 1)         compute dtype
    # w2_ref : (H2, H1)        bf16
    # b2_ref : (H2, 1)         f32
    # w3_ref : (H2, 1)         f32
    # b3_ref : (1, 1)          f32
    # out_ref: (1, TM)         f32              -- lane-dense sigmoid outputs
    cdt = w1_ref.dtype
    xT = xT_ref[...].astype(cdt)        # tiny (data_dim, TM) cast
    w1 = w1_ref[...]
    data_dim = xT.shape[0]

    # ---- Layer 1
    if data_dim <= 16:
        # Tiny contraction depth -> VPU outer-product accumulate (MXU would be wasted).
        h1 = w1[:, 0:1] * xT[0:1, :]
        for k in range(1, data_dim):    # static, unrolled
            h1 = h1 + w1[:, k:k + 1] * xT[k:k + 1, :]
    else:
        # Realistic input widths -> route the contraction to the MXU instead.
        h1 = jnp.dot(w1.astype(jnp.bfloat16), xT.astype(jnp.bfloat16),
                     preferred_element_type=jnp.float32).astype(cdt)
    h1 = _leaky_relu(h1 + b1_ref[...])  # (H1, TM), compute dtype

    # Dropout(0.3): identity (eval-mode semantics).

    # ---- Layer 2: the only real matmul -> MXU, bf16 operands, f32 accumulation.
    h2 = jnp.dot(w2_ref[...], h1.astype(jnp.bfloat16),
                 preferred_element_type=jnp.float32)            # (H2, TM) f32
    h2 = _leaky_relu(h2 + b2_ref[...])

    # Dropout(0.3): identity (eval-mode semantics).

    # ---- Layer 3: N = 1 -> VPU multiply + sublane (XLU) reduction, not the MXU.
    logits = jnp.sum(h2 * w3_ref[...], axis=0, keepdims=True) + b3_ref[...]   # (1, TM)
    out_ref[...] = jax.nn.sigmoid(logits).astype(out_ref.dtype)


def discriminator_forward(x, params, *, block_batch=None):
    """x: (B, data_dim) float32. params: PyTorch-layout w1,b1,w2,b2,w3,b3."""
    B, data_dim = x.shape
    gen = _detect_generation()
    cap, compute_dtype, min_tiles = _GEN_CONFIG[gen]
    if block_batch is not None:
        cap = max(128, int(block_batch))
    # Don't force extra tiles when the batch is too small to split usefully.
    min_tiles = min(min_tiles, max(1, B // 128))

    # Tile adapts to B: avoids padding a small batch up to a huge fixed tile,
    # and (on v7x) splits into >=2 balanced tiles so both TensorCores work.
    tm = max(128, min(cap, _round_up(pl.cdiv(B, min_tiles), 128)))
    n_tiles = pl.cdiv(B, tm)
    b_pad = n_tiles * tm

    # PyTorch nn.Linear weights are (out, in): already the transposed layout we want.
    w1 = params["w1"].astype(compute_dtype)                   # (H1, data_dim)
    b1 = params["b1"].reshape(H1, 1).astype(compute_dtype)
    w2 = params["w2"].astype(jnp.bfloat16)                    # (H2, H1) MXU operand
    b2 = params["b2"].reshape(H2, 1).astype(jnp.float32)
    w3 = params["w3"].reshape(1, H2).T.astype(jnp.float32)    # (H2, 1)
    b3 = params["b3"].reshape(1, 1).astype(jnp.float32)

    # x is tiny (B x data_dim): the transpose is negligible; the tail pad is at
    # most min_tiles*127 columns because tm adapts to B.
    xT = x.astype(jnp.float32).T
    if b_pad != B:
        xT = jnp.pad(xT, ((0, 0), (0, b_pad - B)))

    def resident(i):            # weights/biases: same block every grid step
        return (0, 0)

    in_specs = [
        pl.BlockSpec((data_dim, tm), lambda i: (0, i)),   # x tile, streamed
        pl.BlockSpec(w1.shape, resident),
        pl.BlockSpec(b1.shape, resident),
        pl.BlockSpec(w2.shape, resident),
        pl.BlockSpec(b2.shape, resident),
        pl.BlockSpec(w3.shape, resident),
        pl.BlockSpec(b3.shape, resident),
    ]
    out_specs = pl.BlockSpec((1, tm), lambda i: (0, i))    # lane-dense output row

    flops = 2 * b_pad * (data_dim * H1 + H1 * H2 + H2)
    bytes_accessed = int(
        xT.size * 4 + b_pad * 4
        + w1.size * w1.dtype.itemsize + b1.size * b1.dtype.itemsize
        + w2.size * 2 + b2.size * 4 + w3.size * 4 + b3.size * 4
    )
    cost = pl.CostEstimate(flops=flops, transcendentals=b_pad,
                           bytes_accessed=bytes_accessed)

    out_row = pl.pallas_call(
        _disc_kernel,
        out_shape=jax.ShapeDtypeStruct((1, b_pad), jnp.float32),
        grid=(n_tiles,),
        in_specs=in_specs,
        out_specs=out_specs,
        compiler_params=pltpu.CompilerParams(
            dimension_semantics=("parallel",)),
        cost_estimate=cost,
    )(xT, w1, b1, w2, b2, w3, b3)

    return out_row[0, :B].reshape(B, 1)


def init_params(key, data_dim):
    """PyTorch nn.Linear-style init: uniform(+-1/sqrt(fan_in)), weight (out, in)."""
    dims = [(data_dim, H1), (H1, H2), (H2, 1)]
    params = {}
    keys = jax.random.split(key, 2 * len(dims))
    for i, (fan_in, fan_out) in enumerate(dims):
        bound = 1.0 / (fan_in ** 0.5)
        w = jax.random.uniform(keys[2 * i], (fan_out, fan_in),
                               minval=-bound, maxval=bound, dtype=jnp.float32)
        b = jax.random.uniform(keys[2 * i + 1], (fan_out,),
                               minval=-bound, maxval=bound, dtype=jnp.float32)
        params[f"w{i + 1}"] = w
        params[f"b{i + 1}"] = b
    return params


def _reference_forward(x, params):
    """Pure-JAX f32 reference (eval-mode dropout)."""
    def lrelu(v):
        return jnp.where(v >= 0, v, NEG_SLOPE * v)
    h1 = lrelu(x @ params["w1"].T + params["b1"])
    h2 = lrelu(h1 @ params["w2"].T + params["b2"])
    logits = h2 @ params["w3"].T + params["b3"]
    return jax.nn.sigmoid(logits)


if __name__ == "__main__":
    data_dim = 2
    batch = 300           # not a multiple of 128 -> exercises padding / ragged tail

    key = jax.random.PRNGKey(0)
    k_params, k_x = jax.random.split(key)

    params = init_params(k_params, data_dim)
    x = jax.random.normal(k_x, (batch, data_dim), dtype=jnp.float32)

    out = discriminator_forward(x, params)          # per-generation tile selection
    jax.block_until_ready(out)

    assert out.shape == (batch, 1)
    assert bool(jnp.all((out > 0.0) & (out < 1.0)))

    ref = _reference_forward(x, params)
    max_err = float(jnp.max(jnp.abs(out - ref)))
    assert max_err < 2e-2, f"mismatch vs reference: {max_err}"

    # Also exercise an explicit multi-tile grid (forces >=2 grid steps).
    out2 = discriminator_forward(x, params, block_batch=128)
    jax.block_until_ready(out2)
    max_err2 = float(jnp.max(jnp.abs(out2 - ref)))
    assert max_err2 < 2e-2, f"mismatch vs reference (tiled): {max_err2}"

    print("KERNEL_OK")
</pallas_src>

<mosaic_0001>
module attributes {stable_mosaic.version = 11 : i64} {
  func.func @_disc_kernel(%arg0: i32, %arg1: memref<2x384xf32, #tpu.memory_space<vmem>>, %arg2: memref<256x2xf32, #tpu.memory_space<vmem>>, %arg3: memref<256x1xf32, #tpu.memory_space<vmem>>, %arg4: memref<128x256xbf16, #tpu.memory_space<vmem>>, %arg5: memref<128x1xf32, #tpu.memory_space<vmem>>, %arg6: memref<128x1xf32, #tpu.memory_space<vmem>>, %arg7: memref<1x1xf32, #tpu.memory_space<vmem>>, %arg8: memref<1x384xf32, #tpu.memory_space<vmem>>) attributes {dimension_semantics = [#tpu.dimension_semantics<parallel>], iteration_bounds = array<i64: 1>, scalar_prefetch = 0 : i64, scratch_operands = 0 : i64, tpu.core_type = #tpu.core_type<tc>, window_params = [{transform_indices = @transform_0, window_bounds = array<i64: 2, 384>}, {pipeline_mode = #tpu.pipeline_mode<synchronous>, transform_indices = @transform_1, window_bounds = array<i64: 256, 2>}, {pipeline_mode = #tpu.pipeline_mode<synchronous>, transform_indices = @transform_2, window_bounds = array<i64: 256, 1>}, {pipeline_mode = #tpu.pipeline_mode<synchronous>, transform_indices = @transform_3, window_bounds = array<i64: 128, 256>}, {pipeline_mode = #tpu.pipeline_mode<synchronous>, transform_indices = @transform_4, window_bounds = array<i64: 128, 1>}, {pipeline_mode = #tpu.pipeline_mode<synchronous>, transform_indices = @transform_5, window_bounds = array<i64: 128, 1>}, {pipeline_mode = #tpu.pipeline_mode<synchronous>, transform_indices = @transform_6, window_bounds = array<i64: 1, 1>}, {transform_indices = @transform_7, window_bounds = array<i64: 1, 384>}]} {
    %c0 = arith.constant 0 : index
    %c0_0 = arith.constant 0 : index
    %0 = vector.load %arg1[%c0, %c0_0] : memref<2x384xf32, #tpu.memory_space<vmem>>, vector<2x384xf32>
    %c0_1 = arith.constant 0 : index
    %c0_2 = arith.constant 0 : index
    %1 = vector.load %arg2[%c0_1, %c0_2] : memref<256x2xf32, #tpu.memory_space<vmem>>, vector<256x2xf32>
    %2 = vector.extract_strided_slice %1 {offsets = [0, 0], sizes = [256, 1], strides = [1, 1]} : vector<256x2xf32> to vector<256x1xf32>
    %3 = vector.extract_strided_slice %0 {offsets = [0, 0], sizes = [1, 384], strides = [1, 1]} : vector<2x384xf32> to vector<1x384xf32>
    %4 = vector.broadcast %2 : vector<256x1xf32> to vector<256x384xf32>
    %5 = vector.broadcast %3 : vector<1x384xf32> to vector<256x384xf32>
    %6 = arith.mulf %4, %5 : vector<256x384xf32>
    %7 = vector.extract_strided_slice %1 {offsets = [0, 1], sizes = [256, 1], strides = [1, 1]} : vector<256x2xf32> to vector<256x1xf32>
    %8 = vector.extract_strided_slice %0 {offsets = [1, 0], sizes = [1, 384], strides = [1, 1]} : vector<2x384xf32> to vector<1x384xf32>
    %9 = vector.broadcast %7 : vector<256x1xf32> to vector<256x384xf32>
    %10 = vector.broadcast %8 : vector<1x384xf32> to vector<256x384xf32>
    %11 = arith.mulf %9, %10 : vector<256x384xf32>
    %12 = arith.addf %6, %11 : vector<256x384xf32>
    %c0_3 = arith.constant 0 : index
    %c0_4 = arith.constant 0 : index
    %13 = vector.load %arg3[%c0_3, %c0_4] : memref<256x1xf32, #tpu.memory_space<vmem>>, vector<256x1xf32>
    %14 = vector.broadcast %13 : vector<256x1xf32> to vector<256x384xf32>
    %15 = arith.addf %12, %14 : vector<256x384xf32>
    %cst = arith.constant 2.000000e-01 : f32
    %16 = vector.broadcast %cst : f32 to vector<256x384xf32>
    %17 = arith.mulf %16, %15 : vector<256x384xf32>
    %18 = arith.maximumf %15, %17 : vector<256x384xf32>
    %c0_5 = arith.constant 0 : index
    %c0_6 = arith.constant 0 : index
    %19 = vector.load %arg4[%c0_5, %c0_6] : memref<128x256xbf16, #tpu.memory_space<vmem>>, vector<128x256xbf16>
    %20 = arith.truncf %18 : vector<256x384xf32> to vector<256x384xbf16>
    %cst_7 = arith.constant dense<0.000000e+00> : vector<128x384xf32>
    %21 = tpu.matmul %19, %20, %cst_7 {dimension_numbers = #tpu.dot_dimension_numbers<[1], [0], [0], [1], [0, 0, 1, 1], [], []>} : vector<128x256xbf16>, vector<256x384xbf16>, vector<128x384xf32> -> vector<128x384xf32>
    %c0_8 = arith.constant 0 : index
    %c0_9 = arith.constant 0 : index
    %22 = vector.load %arg5[%c0_8, %c0_9] : memref<128x1xf32, #tpu.memory_space<vmem>>, vector<128x1xf32>
    %23 = vector.broadcast %22 : vector<128x1xf32> to vector<128x384xf32>
    %24 = arith.addf %21, %23 : vector<128x384xf32>
    %cst_10 = arith.constant 2.000000e-01 : f32
    %25 = vector.broadcast %cst_10 : f32 to vector<128x384xf32>
    %26 = arith.mulf %25, %24 : vector<128x384xf32>
    %27 = arith.maximumf %24, %26 : vector<128x384xf32>
    %c0_11 = arith.constant 0 : index
    %c0_12 = arith.constant 0 : index
    %28 = vector.load %arg6[%c0_11, %c0_12] : memref<128x1xf32, #tpu.memory_space<vmem>>, vector<128x1xf32>
    %29 = vector.broadcast %28 : vector<128x1xf32> to vector<128x384xf32>
    %30 = arith.mulf %27, %29 : vector<128x384xf32>
    %cst_13 = arith.constant dense<0.000000e+00> : vector<384xf32>
    %31 = vector.multi_reduction <add>, %30, %cst_13 [0] : vector<128x384xf32> to vector<384xf32>
    %32 = vector.shape_cast %31 : vector<384xf32> to vector<1x384xf32>
    %c0_14 = arith.constant 0 : index
    %c0_15 = arith.constant 0 : index
    %33 = vector.load %arg7[%c0_14, %c0_15] : memref<1x1xf32, #tpu.memory_space<vmem>>, vector<1x1xf32>
    %34 = vector.broadcast %33 : vector<1x1xf32> to vector<1x384xf32>
    %35 = arith.addf %32, %34 : vector<1x384xf32>
    %36 = arith.negf %35 : vector<1x384xf32>
    %37 = math.exp %36 : vector<1x384xf32>
    %cst_16 = arith.constant 1.000000e+00 : f32
    %38 = vector.broadcast %cst_16 : f32 to vector<1x384xf32>
    %39 = arith.addf %38, %37 : vector<1x384xf32>
    %40 = arith.divf %38, %39 : vector<1x384xf32>
    %c0_17 = arith.constant 0 : index
    %c0_18 = arith.constant 0 : index
    %41 = vector.load %arg8[%c0_17, %c0_18] : memref<1x384xf32, #tpu.memory_space<vmem>>, vector<1x384xf32>
    tpu.vector_store %arg8[%c0_17, %c0_18], %40 {strides = array<i32>} : memref<1x384xf32, #tpu.memory_space<vmem>>, vector<1x384xf32>,
    return
  }
  func.func @transform_0(%arg0: i32) -> (i32, i32) {
    %c0_i32 = arith.constant 0 : i32
    %c0_i32_0 = arith.constant 0 : i32
    return %c0_i32, %arg0 : i32, i32
  }
  func.func @transform_1(%arg0: i32) -> (i32, i32) {
    %c0_i32 = arith.constant 0 : i32
    %c0_i32_0 = arith.constant 0 : i32
    %c0_i32_1 = arith.constant 0 : i32
    return %c0_i32, %c0_i32_0 : i32, i32
  }
  func.func @transform_2(%arg0: i32) -> (i32, i32) {
    %c0_i32 = arith.constant 0 : i32
    %c0_i32_0 = arith.constant 0 : i32
    %c0_i32_1 = arith.constant 0 : i32
    return %c0_i32, %c0_i32_0 : i32, i32
  }
  func.func @transform_3(%arg0: i32) -> (i32, i32) {
    %c0_i32 = arith.constant 0 : i32
    %c0_i32_0 = arith.constant 0 : i32
    %c0_i32_1 = arith.constant 0 : i32
    return %c0_i32, %c0_i32_0 : i32, i32
  }
  func.func @transform_4(%arg0: i32) -> (i32, i32) {
    %c0_i32 = arith.constant 0 : i32
    %c0_i32_0 = arith.constant 0 : i32
    %c0_i32_1 = arith.constant 0 : i32
    return %c0_i32, %c0_i32_0 : i32, i32
  }
  func.func @transform_5(%arg0: i32) -> (i32, i32) {
    %c0_i32 = arith.constant 0 : i32
    %c0_i32_0 = arith.constant 0 : i32
    %c0_i32_1 = arith.constant 0 : i32
    return %c0_i32, %c0_i32_0 : i32, i32
  }
  func.func @transform_6(%arg0: i32) -> (i32, i32) {
    %c0_i32 = arith.constant 0 : i32
    %c0_i32_0 = arith.constant 0 : i32
    %c0_i32_1 = arith.constant 0 : i32
    return %c0_i32, %c0_i32_0 : i32, i32
  }
  func.func @transform_7(%arg0: i32) -> (i32, i32) {
    %c0_i32 = arith.constant 0 : i32
    %c0_i32_0 = arith.constant 0 : i32
    return %c0_i32, %arg0 : i32, i32
  }
}

</mosaic_0001>

<llo_original>
// kernel: tpu_custom_call.1
$region0: #{tpu_custom_call.1}
  #allocation0 [shape = 'u32[]', space=smem, size = 0x4, offset = 0x4, fixed_abs, tag = 'smem constant byte address 0x4 - core index']
  #allocation1 [shape = 'u32[144,128]{1,0:T(1,128)}', space=vmem, size = 0x12000, scoped, tag = 'internal scratch']
  #allocation2 [shape = 'f32[1,1]{1,0:T(1,128)S(1)}', space=vmem, size = 0x200, scoped, tag = 'scoped memory for tpu_custom_call.1']
  %s0 = inlined_call_operand.vmem [shape: f32[2,384], index: 0, kind: input, shape index: {}]
  %s1 = inlined_call_operand.vmem [shape: f32[256,2], index: 1, kind: input, shape index: {}]
  %s2 = inlined_call_operand.vmem [shape: f32[256,1], index: 2, kind: input, shape index: {}]
  %s3 = inlined_call_operand.vmem [shape: bf16[128,256], index: 3, kind: input, shape index: {}]
  %s4 = inlined_call_operand.vmem [shape: f32[128,1], index: 4, kind: input, shape index: {}]
  %s5 = inlined_call_operand.vmem [shape: f32[128,1], index: 5, kind: input, shape index: {}]
  %s6 = inlined_call_operand.<no memory space> [shape: f32[1,1], index: 6, kind: input, shape index: {}]
  %s7 = inlined_call_operand.hbm [shape: f32[1,384], index: 7, kind: output, shape index: {}]
  %s8 = sld [smem:[#allocation0]]
  $region38: #{tpu_custom_call.1} parent=0
    _
  %s10 = ssub.s32 1, %s8
  %s11 = scalar_select 0, %s10, %s8
  %v12 = vstv %s6
  %13 = vst [vmem:[#allocation2] sm:$0x1] %v12
  $region1: #{tpu_custom_call.1} parent=0
    #allocation3 [shape = 'u8[1536]{0}', space=vmem, size = 0x800, scoped, tag = 'output window, operand 0, single buffered']
    #allocation4 [shape = 's32[1]{0}', space=sflag, size = 0x4, scoped, tag = 'scoped memory for tpu_custom_call.1']
    %14 = vsyncpa [#allocation4], 0
    // Predicated region
    $region2: #{tpu_custom_call.1} parent=1 // pred_check
      _
    $region3: #{tpu_custom_call.1} parent=1 // pred_check_branch
      %16 = sbr.rel (0) target = $region5
    $region4: #{tpu_custom_call.1} parent=1 // pred_region
      _
    $region5: #{tpu_custom_call.1} parent=1 // pred_fallthru
      _
    // Predicated region
    $region6: #{tpu_custom_call.1} parent=1 // pred_check
      _
    $region7: #{tpu_custom_call.1} parent=1 // pred_check_branch
      %18 = sbr.rel (0) target = $region9
    $region8: #{tpu_custom_call.1} parent=1 // pred_region
      _
    $region9: #{tpu_custom_call.1} parent=1 // pred_fallthru
      _
    // Predicated region
    $region10: #{tpu_custom_call.1} parent=1 // pred_check
      _
    $region11: #{tpu_custom_call.1} parent=1 // pred_check_branch
      %20 = sbr.rel (0) target = $region13
    $region12: #{tpu_custom_call.1} parent=1 // pred_region
      _
    $region13: #{tpu_custom_call.1} parent=1 // pred_fallthru
      _
    // Predicated region
    $region14: #{tpu_custom_call.1} parent=1 // pred_check
      _
    $region15: #{tpu_custom_call.1} parent=1 // pred_check_branch
      %22 = sbr.rel (0) target = $region17
    $region16: #{tpu_custom_call.1} parent=1 // pred_region
      _
    $region17: #{tpu_custom_call.1} parent=1 // pred_fallthru
      _
    // Predicated region
    $region18: #{tpu_custom_call.1} parent=1 // pred_check
      _
    $region19: #{tpu_custom_call.1} parent=1 // pred_check_branch
      %24 = sbr.rel (0) target = $region21
    $region20: #{tpu_custom_call.1} parent=1 // pred_region
      _
    $region21: #{tpu_custom_call.1} parent=1 // pred_fallthru
      _
    // Predicated region
    $region22: #{tpu_custom_call.1} parent=1 // pred_check
      _
    $region23: #{tpu_custom_call.1} parent=1 // pred_check_branch
      %26 = sbr.rel (0) target = $region25
    $region24: #{tpu_custom_call.1} parent=1 // pred_region
      _
    $region25: #{tpu_custom_call.1} parent=1 // pred_fallthru
      _
    // Predicated region
    $region26: #{tpu_custom_call.1} parent=1 // pred_check
      _
    $region27: #{tpu_custom_call.1} parent=1 // pred_check_branch
      %28 = sbr.rel (0) target = $region29
    $region28: #{tpu_custom_call.1} parent=1 // pred_region
      _
    $region29: #{tpu_custom_call.1} parent=1 // pred_fallthru
      _
    %v30 = vld [vmem:[%s0] sm:$0x3f]
    %v31 = vld [vmem:[%s1] sm:$0xff]
    %v32 = vld [vmem:[%s1 + $0x8] sm:$0xff]
    %v33 = vld [vmem:[%s1 + $0x10] sm:$0xff]
    %v34 = vld [vmem:[%s1 + $0x18] sm:$0xff]
    %v35 = vld [vmem:[%s1 + $0x20] sm:$0xff]
    %v36 = vld [vmem:[%s1 + $0x28] sm:$0xff]
    %v37 = vld [vmem:[%s1 + $0x30] sm:$0xff]
    %v38 = vld [vmem:[%s1 + $0x38] sm:$0xff]
    %v39 = vld [vmem:[%s1 + $0x40] sm:$0xff]
    %v40 = vld [vmem:[%s1 + $0x48] sm:$0xff]
    %v41 = vld [vmem:[%s1 + $0x50] sm:$0xff]
    %v42 = vld [vmem:[%s1 + $0x58] sm:$0xff]
    %v43 = vld [vmem:[%s1 + $0x60] sm:$0xff]
    %v44 = vld [vmem:[%s1 + $0x68] sm:$0xff]
    %v45 = vld [vmem:[%s1 + $0x70] sm:$0xff]
    %v46 = vld [vmem:[%s1 + $0x78] sm:$0xff]
    %v47 = vld [vmem:[%s1 + $0x80] sm:$0xff]
    %v48 = vld [vmem:[%s1 + $0x88] sm:$0xff]
    %v49 = vld [vmem:[%s1 + $0x90] sm:$0xff]
    %v50 = vld [vmem:[%s1 + $0x98] sm:$0xff]
    %v51 = vld [vmem:[%s1 + $0xa0] sm:$0xff]
    %v52 = vld [vmem:[%s1 + $0xa8] sm:$0xff]
    %v53 = vld [vmem:[%s1 + $0xb0] sm:$0xff]
    %v54 = vld [vmem:[%s1 + $0xb8] sm:$0xff]
    %v55 = vld [vmem:[%s1 + $0xc0] sm:$0xff]
    %v56 = vld [vmem:[%s1 + $0xc8] sm:$0xff]
    %v57 = vld [vmem:[%s1 + $0xd0] sm:$0xff]
    %v58 = vld [vmem:[%s1 + $0xd8] sm:$0xff]
    %v59 = vld [vmem:[%s1 + $0xe0] sm:$0xff]
    %v60 = vld [vmem:[%s1 + $0xe8] sm:$0xff]
    %v61 = vld [vmem:[%s1 + $0xf0] sm:$0xff]
    %v62 = vld [vmem:[%s1 + $0xf8] sm:$0xff]
    %64 = vset.pattern.permute.xlu0 0
    %65 = vperm.xlu0 %64, %v31
    %v66 = vpop.permute.xlu0 %65
    %69 = vset.pattern.permute.xlu0 0
    %70 = vperm.xlu0 %69, %v32
    %v71 = vpop.permute.xlu0 %70
    %74 = vset.pattern.permute.xlu0 0
    %75 = vperm.xlu0 %74, %v33
    %v76 = vpop.permute.xlu0 %75
    %79 = vset.pattern.permute.xlu0 0
    %80 = vperm.xlu0 %79, %v34
    %v81 = vpop.permute.xlu0 %80
    %84 = vset.pattern.permute.xlu0 0
    %85 = vperm.xlu0 %84, %v35
    %v86 = vpop.permute.xlu0 %85
    %89 = vset.pattern.permute.xlu0 0
    %90 = vperm.xlu0 %89, %v36
    %v91 = vpop.permute.xlu0 %90
    %94 = vset.pattern.permute.xlu0 0
    %95 = vperm.xlu0 %94, %v37
    %v96 = vpop.permute.xlu0 %95
    %99 = vset.pattern.permute.xlu0 0
    %100 = vperm.xlu0 %99, %v38
    %v101 = vpop.permute.xlu0 %100
    %104 = vset.pattern.permute.xlu0 0
    %105 = vperm.xlu0 %104, %v39
    %v106 = vpop.permute.xlu0 %105
    %109 = vset.pattern.permute.xlu0 0
    %110 = vperm.xlu0 %109, %v40
    %v111 = vpop.permute.xlu0 %110
    %114 = vset.pattern.permute.xlu0 0
    %115 = vperm.xlu0 %114, %v41
    %v116 = vpop.permute.xlu0 %115
    %119 = vset.pattern.permute.xlu0 0
    %120 = vperm.xlu0 %119, %v42
    %v121 = vpop.permute.xlu0 %120
    %124 = vset.pattern.permute.xlu0 0
    %125 = vperm.xlu0 %124, %v43
    %v126 = vpop.permute.xlu0 %125
    %129 = vset.pattern.permute.xlu0 0
    %130 = vperm.xlu0 %129, %v44
    %v131 = vpop.permute.xlu0 %130
    %134 = vset.pattern.permute.xlu0 0
    %135 = vperm.xlu0 %134, %v45
    %v136 = vpop.permute.xlu0 %135
    %139 = vset.pattern.permute.xlu0 0
    %140 = vperm.xlu0 %139, %v46
    %v141 = vpop.permute.xlu0 %140
    %144 = vset.pattern.permute.xlu0 0
    %145 = vperm.xlu0 %144, %v47
    %v146 = vpop.permute.xlu0 %145
    %149 = vset.pattern.permute.xlu0 0
    %150 = vperm.xlu0 %149, %v48
    %v151 = vpop.permute.xlu0 %150
    %154 = vset.pattern.permute.xlu0 0
    %155 = vperm.xlu0 %154, %v49
    %v156 = vpop.permute.xlu0 %155
    %159 = vset.pattern.permute.xlu0 0
    %160 = vperm.xlu0 %159, %v50
    %v161 = vpop.permute.xlu0 %160
    %164 = vset.pattern.permute.xlu0 0
    %165 = vperm.xlu0 %164, %v51
    %v166 = vpop.permute.xlu0 %165
    %169 = vset.pattern.permute.xlu0 0
    %170 = vperm.xlu0 %169, %v52
    %v171 = vpop.permute.xlu0 %170
    %174 = vset.pattern.permute.xlu0 0
    %175 = vperm.xlu0 %174, %v53
    %v176 = vpop.permute.xlu0 %175
    %179 = vset.pattern.permute.xlu0 0
    %180 = vperm.xlu0 %179, %v54
    %v181 = vpop.permute.xlu0 %180
    %184 = vset.pattern.permute.xlu0 0
    %185 = vperm.xlu0 %184, %v55
    %v186 = vpop.permute.xlu0 %185
    %189 = vset.pattern.permute.xlu0 0
    %190 = vperm.xlu0 %189, %v56
    %v191 = vpop.permute.xlu0 %190
    %194 = vset.pattern.permute.xlu0 0
    %195 = vperm.xlu0 %194, %v57
    %v196 = vpop.permute.xlu0 %195
    %199 = vset.pattern.permute.xlu0 0
    %200 = vperm.xlu0 %199, %v58
    %v201 = vpop.permute.xlu0 %200
    %204 = vset.pattern.permute.xlu0 0
    %205 = vperm.xlu0 %204, %v59
    %v206 = vpop.permute.xlu0 %205
    %209 = vset.pattern.permute.xlu0 0
    %210 = vperm.xlu0 %209, %v60
    %v211 = vpop.permute.xlu0 %210
    %214 = vset.pattern.permute.xlu0 0
    %215 = vperm.xlu0 %214, %v61
    %v216 = vpop.permute.xlu0 %215
    %219 = vset.pattern.permute.xlu0 0
    %220 = vperm.xlu0 %219, %v62
    %v221 = vpop.permute.xlu0 %220
    %v224 = vlaneseq
    %v225 = vshrl.u32 %v224, 7
    %v226 = vsub.s32 0, %v225
    %v227 = vrot.slane %v30, %v226
    %v228 = vlaneseq
    %v229 = vshrl.u32 %v228, 7
    %v230 = vsub.s32 2, %v229
    %v231 = vrot.slane %v30, %v230
    %v232 = vlaneseq
    %v233 = vshrl.u32 %v232, 7
    %v234 = vsub.s32 4, %v233
    %v235 = vrot.slane %v30, %v234
    %v239 = vlaneseq
    %v240 = vshrl.u32 %v239, 7
    %v241 = vsub.s32 0, %v240
    %v242 = vrot.slane %v227, %v241
    %v243 = vlaneseq
    %v244 = vshrl.u32 %v243, 7
    %v245 = vsub.s32 0, %v244
    %v246 = vrot.slane %v231, %v245
    %v247 = vlaneseq
    %v248 = vshrl.u32 %v247, 7
    %v249 = vsub.s32 0, %v248
    %v250 = vrot.slane %v235, %v249
    %v251 = vmul.f32 %v66, %v242
    %v252 = vmul.f32 %v66, %v246
    %v253 = vmul.f32 %v66, %v250
    %v254 = vmul.f32 %v71, %v242
    %v255 = vmul.f32 %v71, %v246
    %v256 = vmul.f32 %v71, %v250
    %v257 = vmul.f32 %v76, %v242
    %v258 = vmul.f32 %v76, %v246
    %v259 = vmul.f32 %v76, %v250
    %v260 = vmul.f32 %v81, %v242
    %v261 = vmul.f32 %v81, %v246
    %v262 = vmul.f32 %v81, %v250
    %v263 = vmul.f32 %v86, %v242
    %v264 = vmul.f32 %v86, %v246
    %v265 = vmul.f32 %v86, %v250
    %v266 = vmul.f32 %v91, %v242
    %v267 = vmul.f32 %v91, %v246
    %v268 = vmul.f32 %v91, %v250
    %v269 = vmul.f32 %v96, %v242
    %v270 = vmul.f32 %v96, %v246
    %v271 = vmul.f32 %v96, %v250
    %v272 = vmul.f32 %v101, %v242
    %v273 = vmul.f32 %v101, %v246
    %v274 = vmul.f32 %v101, %v250
    %v275 = vmul.f32 %v106, %v242
    %v276 = vmul.f32 %v106, %v246
    %v277 = vmul.f32 %v106, %v250
    %v278 = vmul.f32 %v111, %v242
    %v279 = vmul.f32 %v111, %v246
    %v280 = vmul.f32 %v111, %v250
    %v281 = vmul.f32 %v116, %v242
    %v282 = vmul.f32 %v116, %v246
    %v283 = vmul.f32 %v116, %v250
    %v284 = vmul.f32 %v121, %v242
    %v285 = vmul.f32 %v121, %v246
    %v286 = vmul.f32 %v121, %v250
    %v287 = vmul.f32 %v126, %v242
    %v288 = vmul.f32 %v126, %v246
    %v289 = vmul.f32 %v126, %v250
    %v290 = vmul.f32 %v131, %v242
    %v291 = vmul.f32 %v131, %v246
    %v292 = vmul.f32 %v131, %v250
    %v293 = vmul.f32 %v136, %v242
    %v294 = vmul.f32 %v136, %v246
    %v295 = vmul.f32 %v136, %v250
    %v296 = vmul.f32 %v141, %v242
    %v297 = vmul.f32 %v141, %v246
    %v298 = vmul.f32 %v141, %v250
    %v299 = vmul.f32 %v146, %v242
    %v300 = vmul.f32 %v146, %v246
    %v301 = vmul.f32 %v146, %v250
    %v302 = vmul.f32 %v151, %v242
    %v303 = vmul.f32 %v151, %v246
    %v304 = vmul.f32 %v151, %v250
    %v305 = vmul.f32 %v156, %v242
    %v306 = vmul.f32 %v156, %v246
    %v307 = vmul.f32 %v156, %v250
    %v308 = vmul.f32 %v161, %v242
    %v309 = vmul.f32 %v161, %v246
    %v310 = vmul.f32 %v161, %v250
    %v311 = vmul.f32 %v166, %v242
    %v312 = vmul.f32 %v166, %v246
    %v313 = vmul.f32 %v166, %v250
    %v314 = vmul.f32 %v171, %v242
    %v315 = vmul.f32 %v171, %v246
    %v316 = vmul.f32 %v171, %v250
    %v317 = vmul.f32 %v176, %v242
    %v318 = vmul.f32 %v176, %v246
    %v319 = vmul.f32 %v176, %v250
    %v320 = vmul.f32 %v181, %v242
    %v321 = vmul.f32 %v181, %v246
    %v322 = vmul.f32 %v181, %v250
    %v323 = vmul.f32 %v186, %v242
    %v324 = vmul.f32 %v186, %v246
    %v325 = vmul.f32 %v186, %v250
    %v326 = vmul.f32 %v191, %v242
    %v327 = vmul.f32 %v191, %v246
    %v328 = vmul.f32 %v191, %v250
    %v329 = vmul.f32 %v196, %v242
    %v330 = vmul.f32 %v196, %v246
    %v331 = vmul.f32 %v196, %v250
    %v332 = vmul.f32 %v201, %v242
    %v333 = vmul.f32 %v201, %v246
    %v334 = vmul.f32 %v201, %v250
    %v335 = vmul.f32 %v206, %v242
    %v336 = vmul.f32 %v206, %v246
    %v337 = vmul.f32 %v206, %v250
    %v338 = vmul.f32 %v211, %v242
    %v339 = vmul.f32 %v211, %v246
    %v340 = vmul.f32 %v211, %v250
    %v341 = vmul.f32 %v216, %v242
    %v342 = vmul.f32 %v216, %v246
    %v343 = vmul.f32 %v216, %v250
    %v344 = vmul.f32 %v221, %v242
    %v345 = vmul.f32 %v221, %v246
    %v346 = vmul.f32 %v221, %v250
    %347 = vset.pattern.permute.xlu0 1
    %348 = vperm.xlu0 %347, %v31
    %v349 = vpop.permute.xlu0 %348
    %351 = vset.pattern.permute.xlu0 1
    %352 = vperm.xlu0 %351, %v32
    %v353 = vpop.permute.xlu0 %352
    %355 = vset.pattern.permute.xlu0 1
    %356 = vperm.xlu0 %355, %v33
    %v357 = vpop.permute.xlu0 %356
    %359 = vset.pattern.permute.xlu0 1
    %360 = vperm.xlu0 %359, %v34
    %v361 = vpop.permute.xlu0 %360
    %363 = vset.pattern.permute.xlu0 1
    %364 = vperm.xlu0 %363, %v35
    %v365 = vpop.permute.xlu0 %364
    %367 = vset.pattern.permute.xlu0 1
    %368 = vperm.xlu0 %367, %v36
    %v369 = vpop.permute.xlu0 %368
    %371 = vset.pattern.permute.xlu0 1
    %372 = vperm.xlu0 %371, %v37
    %v373 = vpop.permute.xlu0 %372
    %375 = vset.pattern.permute.xlu0 1
    %376 = vperm.xlu0 %375, %v38
    %v377 = vpop.permute.xlu0 %376
    %379 = vset.pattern.permute.xlu0 1
    %380 = vperm.xlu0 %379, %v39
    %v381 = vpop.permute.xlu0 %380
    %383 = vset.pattern.permute.xlu0 1
    %384 = vperm.xlu0 %383, %v40
    %v385 = vpop.permute.xlu0 %384
    %387 = vset.pattern.permute.xlu0 1
    %388 = vperm.xlu0 %387, %v41
    %v389 = vpop.permute.xlu0 %388
    %391 = vset.pattern.permute.xlu0 1
    %392 = vperm.xlu0 %391, %v42
    %v393 = vpop.permute.xlu0 %392
    %395 = vset.pattern.permute.xlu0 1
    %396 = vperm.xlu0 %395, %v43
    %v397 = vpop.permute.xlu0 %396
    %399 = vset.pattern.permute.xlu0 1
    %400 = vperm.xlu0 %399, %v44
    %v401 = vpop.permute.xlu0 %400
    %403 = vset.pattern.permute.xlu0 1
    %404 = vperm.xlu0 %403, %v45
    %v405 = vpop.permute.xlu0 %404
    %407 = vset.pattern.permute.xlu0 1
    %408 = vperm.xlu0 %407, %v46
    %v409 = vpop.permute.xlu0 %408
    %411 = vset.pattern.permute.xlu0 1
    %412 = vperm.xlu0 %411, %v47
    %v413 = vpop.permute.xlu0 %412
    %415 = vset.pattern.permute.xlu0 1
    %416 = vperm.xlu0 %415, %v48
    %v417 = vpop.permute.xlu0 %416
    %419 = vset.pattern.permute.xlu0 1
    %420 = vperm.xlu0 %419, %v49
    %v421 = vpop.permute.xlu0 %420
    %423 = vset.pattern.permute.xlu0 1
    %424 = vperm.xlu0 %423, %v50
    %v425 = vpop.permute.xlu0 %424
    %427 = vset.pattern.permute.xlu0 1
    %428 = vperm.xlu0 %427, %v51
    %v429 = vpop.permute.xlu0 %428
    %431 = vset.pattern.permute.xlu0 1
    %432 = vperm.xlu0 %431, %v52
    %v433 = vpop.permute.xlu0 %432
    %435 = vset.pattern.permute.xlu0 1
    %436 = vperm.xlu0 %435, %v53
    %v437 = vpop.permute.xlu0 %436
    %439 = vset.pattern.permute.xlu0 1
    %440 = vperm.xlu0 %439, %v54
    %v441 = vpop.permute.xlu0 %440
    %443 = vset.pattern.permute.xlu0 1
    %444 = vperm.xlu0 %443, %v55
    %v445 = vpop.permute.xlu0 %444
    %447 = vset.pattern.permute.xlu0 1
    %448 = vperm.xlu0 %447, %v56
    %v449 = vpop.permute.xlu0 %448
    %451 = vset.pattern.permute.xlu0 1
    %452 = vperm.xlu0 %451, %v57
    %v453 = vpop.permute.xlu0 %452
    %455 = vset.pattern.permute.xlu0 1
    %456 = vperm.xlu0 %455, %v58
    %v457 = vpop.permute.xlu0 %456
    %459 = vset.pattern.permute.xlu0 1
    %460 = vperm.xlu0 %459, %v59
    %v461 = vpop.permute.xlu0 %460
    %463 = vset.pattern.permute.xlu0 1
    %464 = vperm.xlu0 %463, %v60
    %v465 = vpop.permute.xlu0 %464
    %467 = vset.pattern.permute.xlu0 1
    %468 = vperm.xlu0 %467, %v61
    %v469 = vpop.permute.xlu0 %468
    %471 = vset.pattern.permute.xlu0 1
    %472 = vperm.xlu0 %471, %v62
    %v473 = vpop.permute.xlu0 %472
    %v475 = vlaneseq
    %v476 = vshrl.u32 %v475, 7
    %v477 = vsub.s32 1, %v476
    %v478 = vrot.slane %v30, %v477
    %v479 = vlaneseq
    %v480 = vshrl.u32 %v479, 7
    %v481 = vsub.s32 3, %v480
    %v482 = vrot.slane %v30, %v481
    %v483 = vlaneseq
    %v484 = vshrl.u32 %v483, 7
    %v485 = vsub.s32 5, %v484
    %v486 = vrot.slane %v30, %v485
    %v490 = vlaneseq
    %v491 = vshrl.u32 %v490, 7
    %v492 = vsub.s32 1, %v491
    %v493 = vrot.slane %v478, %v492
    %v494 = vlaneseq
    %v495 = vshrl.u32 %v494, 7
    %v496 = vsub.s32 1, %v495
    %v497 = vrot.slane %v482, %v496
    %v498 = vlaneseq
    %v499 = vshrl.u32 %v498, 7
    %v500 = vsub.s32 1, %v499
    %v501 = vrot.slane %v486, %v500
    %v502 = vmul.f32 %v349, %v493
    %v503 = vmul.f32 %v349, %v497
    %v504 = vmul.f32 %v349, %v501
    %v505 = vmul.f32 %v353, %v493
    %v506 = vmul.f32 %v353, %v497
    %v507 = vmul.f32 %v353, %v501
    %v508 = vmul.f32 %v357, %v493
    %v509 = vmul.f32 %v357, %v497
    %v510 = vmul.f32 %v357, %v501
    %v511 = vmul.f32 %v361, %v493
    %v512 = vmul.f32 %v361, %v497
    %v513 = vmul.f32 %v361, %v501
    %v514 = vmul.f32 %v365, %v493
    %v515 = vmul.f32 %v365, %v497
    %v516 = vmul.f32 %v365, %v501
    %v517 = vmul.f32 %v369, %v493
    %v518 = vmul.f32 %v369, %v497
    %v519 = vmul.f32 %v369, %v501
    %v520 = vmul.f32 %v373, %v493
    %v521 = vmul.f32 %v373, %v497
    %v522 = vmul.f32 %v373, %v501
    %v523 = vmul.f32 %v377, %v493
    %v524 = vmul.f32 %v377, %v497
    %v525 = vmul.f32 %v377, %v501
    %v526 = vmul.f32 %v381, %v493
    %v527 = vmul.f32 %v381, %v497
    %v528 = vmul.f32 %v381, %v501
    %v529 = vmul.f32 %v385, %v493
    %v530 = vmul.f32 %v385, %v497
    %v531 = vmul.f32 %v385, %v501
    %v532 = vmul.f32 %v389, %v493
    %v533 = vmul.f32 %v389, %v497
    %v534 = vmul.f32 %v389, %v501
    %v535 = vmul.f32 %v393, %v493
    %v536 = vmul.f32 %v393, %v497
    %v537 = vmul.f32 %v393, %v501
    %v538 = vmul.f32 %v397, %v493
    %v539 = vmul.f32 %v397, %v497
    %v540 = vmul.f32 %v397, %v501
    %v541 = vmul.f32 %v401, %v493
    %v542 = vmul.f32 %v401, %v497
    %v543 = vmul.f32 %v401, %v501
    %v544 = vmul.f32 %v405, %v493
    %v545 = vmul.f32 %v405, %v497
    %v546 = vmul.f32 %v405, %v501
    %v547 = vmul.f32 %v409, %v493
    %v548 = vmul.f32 %v409, %v497
    %v549 = vmul.f32 %v409, %v501
    %v550 = vmul.f32 %v413, %v493
    %v551 = vmul.f32 %v413, %v497
    %v552 = vmul.f32 %v413, %v501
    %v553 = vmul.f32 %v417, %v493
    %v554 = vmul.f32 %v417, %v497
    %v555 = vmul.f32 %v417, %v501
    %v556 = vmul.f32 %v421, %v493
    %v557 = vmul.f32 %v421, %v497
    %v558 = vmul.f32 %v421, %v501
    %v559 = vmul.f32 %v425, %v493
    %v560 = vmul.f32 %v425, %v497
    %v561 = vmul.f32 %v425, %v501
    %v562 = vmul.f32 %v429, %v493
    %v563 = vmul.f32 %v429, %v497
    %v564 = vmul.f32 %v429, %v501
    %v565 = vmul.f32 %v433, %v493
    %v566 = vmul.f32 %v433, %v497
    %v567 = vmul.f32 %v433, %v501
    %v568 = vmul.f32 %v437, %v493
    %v569 = vmul.f32 %v437, %v497
    %v570 = vmul.f32 %v437, %v501
    %v571 = vmul.f32 %v441, %v493
    %v572 = vmul.f32 %v441, %v497
    %v573 = vmul.f32 %v441, %v501
    %v574 = vmul.f32 %v445, %v493
    %v575 = vmul.f32 %v445, %v497
    %v576 = vmul.f32 %v445, %v501
    %v577 = vmul.f32 %v449, %v493
    %v578 = vmul.f32 %v449, %v497
    %v579 = vmul.f32 %v449, %v501
    %v580 = vmul.f32 %v453, %v493
    %v581 = vmul.f32 %v453, %v497
    %v582 = vmul.f32 %v453, %v501
    %v583 = vmul.f32 %v457, %v493
    %v584 = vmul.f32 %v457, %v497
    %v585 = vmul.f32 %v457, %v501
    %v586 = vmul.f32 %v461, %v493
    %v587 = vmul.f32 %v461, %v497
    %v588 = vmul.f32 %v461, %v501
    %v589 = vmul.f32 %v465, %v493
    %v590 = vmul.f32 %v465, %v497
    %v591 = vmul.f32 %v465, %v501
    %v592 = vmul.f32 %v469, %v493
    %v593 = vmul.f32 %v469, %v497
    %v594 = vmul.f32 %v469, %v501
    %v595 = vmul.f32 %v473, %v493
    %v596 = vmul.f32 %v473, %v497
    %v597 = vmul.f32 %v473, %v501
    %v598 = vadd.f32 %v251, %v502
    %v599 = vadd.f32 %v252, %v503
    %v600 = vadd.f32 %v253, %v504
    %v601 = vadd.f32 %v254, %v505
    %v602 = vadd.f32 %v255, %v506
    %v603 = vadd.f32 %v256, %v507
    %v604 = vadd.f32 %v257, %v508
    %v605 = vadd.f32 %v258, %v509
    %v606 = vadd.f32 %v259, %v510
    %v607 = vadd.f32 %v260, %v511
    %v608 = vadd.f32 %v261, %v512
    %v609 = vadd.f32 %v262, %v513
    %v610 = vadd.f32 %v263, %v514
    %v611 = vadd.f32 %v264, %v515
    %v612 = vadd.f32 %v265, %v516
    %v613 = vadd.f32 %v266, %v517
    %v614 = vadd.f32 %v267, %v518
    %v615 = vadd.f32 %v268, %v519
    %v616 = vadd.f32 %v269, %v520
    %v617 = vadd.f32 %v270, %v521
    %v618 = vadd.f32 %v271, %v522
    %v619 = vadd.f32 %v272, %v523
    %v620 = vadd.f32 %v273, %v524
    %v621 = vadd.f32 %v274, %v525
    %v622 = vadd.f32 %v275, %v526
    %v623 = vadd.f32 %v276, %v527
    %v624 = vadd.f32 %v277, %v528
    %v625 = vadd.f32 %v278, %v529
    %v626 = vadd.f32 %v279, %v530
    %v627 = vadd.f32 %v280, %v531
    %v628 = vadd.f32 %v281, %v532
    %v629 = vadd.f32 %v282, %v533
    %v630 = vadd.f32 %v283, %v534
    %v631 = vadd.f32 %v284, %v535
    %v632 = vadd.f32 %v285, %v536
    %v633 = vadd.f32 %v286, %v537
    %v634 = vadd.f32 %v287, %v538
    %v635 = vadd.f32 %v288, %v539
    %v636 = vadd.f32 %v289, %v540
    %v637 = vadd.f32 %v290, %v541
    %v638 = vadd.f32 %v291, %v542
    %v639 = vadd.f32 %v292, %v543
    %v640 = vadd.f32 %v293, %v544
    %v641 = vadd.f32 %v294, %v545
    %v642 = vadd.f32 %v295, %v546
    %v643 = vadd.f32 %v296, %v547
    %v644 = vadd.f32 %v297, %v548
    %v645 = vadd.f32 %v298, %v549
    %v646 = vadd.f32 %v299, %v550
    %v647 = vadd.f32 %v300, %v551
    %v648 = vadd.f32 %v301, %v552
    %v649 = vadd.f32 %v302, %v553
    %v650 = vadd.f32 %v303, %v554
    %v651 = vadd.f32 %v304, %v555
    %v652 = vadd.f32 %v305, %v556
    %v653 = vadd.f32 %v306, %v557
    %v654 = vadd.f32 %v307, %v558
    %v655 = vadd.f32 %v308, %v559
    %v656 = vadd.f32 %v309, %v560
    %v657 = vadd.f32 %v310, %v561
    %v658 = vadd.f32 %v311, %v562
    %v659 = vadd.f32 %v312, %v563
    %v660 = vadd.f32 %v313, %v564
    %v661 = vadd.f32 %v314, %v565
    %v662 = vadd.f32 %v315, %v566
    %v663 = vadd.f32 %v316, %v567
    %v664 = vadd.f32 %v317, %v568
    %v665 = vadd.f32 %v318, %v569
    %v666 = vadd.f32 %v319, %v570
    %v667 = vadd.f32 %v320, %v571
    %v668 = vadd.f32 %v321, %v572
    %v669 = vadd.f32 %v322, %v573
    %v670 = vadd.f32 %v323, %v574
    %v671 = vadd.f32 %v324, %v575
    %v672 = vadd.f32 %v325, %v576
    %v673 = vadd.f32 %v326, %v577
    %v674 = vadd.f32 %v327, %v578
    %v675 = vadd.f32 %v328, %v579
    %v676 = vadd.f32 %v329, %v580
    %v677 = vadd.f32 %v330, %v581
    %v678 = vadd.f32 %v331, %v582
    %v679 = vadd.f32 %v332, %v583
    %v680 = vadd.f32 %v333, %v584
    %v681 = vadd.f32 %v334, %v585
    %v682 = vadd.f32 %v335, %v586
    %v683 = vadd.f32 %v336, %v587
    %v684 = vadd.f32 %v337, %v588
    %v685 = vadd.f32 %v338, %v589
    %v686 = vadd.f32 %v339, %v590
    %v687 = vadd.f32 %v340, %v591
    %v688 = vadd.f32 %v341, %v592
    %v689 = vadd.f32 %v342, %v593
    %v690 = vadd.f32 %v343, %v594
    %v691 = vadd.f32 %v344, %v595
    %v692 = vadd.f32 %v345, %v596
    %v693 = vadd.f32 %v346, %v597
    %v694 = vld [vmem:[%s2] sm:$0xff]
    %v695 = vld [vmem:[%s2 + $0x8] sm:$0xff]
    %v696 = vld [vmem:[%s2 + $0x10] sm:$0xff]
    %v697 = vld [vmem:[%s2 + $0x18] sm:$0xff]
    %v698 = vld [vmem:[%s2 + $0x20] sm:$0xff]
    %v699 = vld [vmem:[%s2 + $0x28] sm:$0xff]
    %v700 = vld [vmem:[%s2 + $0x30] sm:$0xff]
    %v701 = vld [vmem:[%s2 + $0x38] sm:$0xff]
    %v702 = vld [vmem:[%s2 + $0x40] sm:$0xff]
    %v703 = vld [vmem:[%s2 + $0x48] sm:$0xff]
    %v704 = vld [vmem:[%s2 + $0x50] sm:$0xff]
    %v705 = vld [vmem:[%s2 + $0x58] sm:$0xff]
    %v706 = vld [vmem:[%s2 + $0x60] sm:$0xff]
    %v707 = vld [vmem:[%s2 + $0x68] sm:$0xff]
    %v708 = vld [vmem:[%s2 + $0x70] sm:$0xff]
    %v709 = vld [vmem:[%s2 + $0x78] sm:$0xff]
    %v710 = vld [vmem:[%s2 + $0x80] sm:$0xff]
    %v711 = vld [vmem:[%s2 + $0x88] sm:$0xff]
    %v712 = vld [vmem:[%s2 + $0x90] sm:$0xff]
    %v713 = vld [vmem:[%s2 + $0x98] sm:$0xff]
    %v714 = vld [vmem:[%s2 + $0xa0] sm:$0xff]
    %v715 = vld [vmem:[%s2 + $0xa8] sm:$0xff]
    %v716 = vld [vmem:[%s2 + $0xb0] sm:$0xff]
    %v717 = vld [vmem:[%s2 + $0xb8] sm:$0xff]
    %v718 = vld [vmem:[%s2 + $0xc0] sm:$0xff]
    %v719 = vld [vmem:[%s2 + $0xc8] sm:$0xff]
    %v720 = vld [vmem:[%s2 + $0xd0] sm:$0xff]
    %v721 = vld [vmem:[%s2 + $0xd8] sm:$0xff]
    %v722 = vld [vmem:[%s2 + $0xe0] sm:$0xff]
    %v723 = vld [vmem:[%s2 + $0xe8] sm:$0xff]
    %v724 = vld [vmem:[%s2 + $0xf0] sm:$0xff]
    %v725 = vld [vmem:[%s2 + $0xf8] sm:$0xff]
    %727 = vset.pattern.permute.xlu0 0
    %728 = vperm.xlu0 %727, %v694
    %v729 = vpop.permute.xlu0 %728
    %732 = vset.pattern.permute.xlu0 0
    %733 = vperm.xlu0 %732, %v695
    %v734 = vpop.permute.xlu0 %733
    %737 = vset.pattern.permute.xlu0 0
    %738 = vperm.xlu0 %737, %v696
    %v739 = vpop.permute.xlu0 %738
    %742 = vset.pattern.permute.xlu0 0
    %743 = vperm.xlu0 %742, %v697
    %v744 = vpop.permute.xlu0 %743
    %747 = vset.pattern.permute.xlu0 0
    %748 = vperm.xlu0 %747, %v698
    %v749 = vpop.permute.xlu0 %748
    %752 = vset.pattern.permute.xlu0 0
    %753 = vperm.xlu0 %752, %v699
    %v754 = vpop.permute.xlu0 %753
    %757 = vset.pattern.permute.xlu0 0
    %758 = vperm.xlu0 %757, %v700
    %v759 = vpop.permute.xlu0 %758
    %762 = vset.pattern.permute.xlu0 0
    %763 = vperm.xlu0 %762, %v701
    %v764 = vpop.permute.xlu0 %763
    %767 = vset.pattern.permute.xlu0 0
    %768 = vperm.xlu0 %767, %v702
    %v769 = vpop.permute.xlu0 %768
    %772 = vset.pattern.permute.xlu0 0
    %773 = vperm.xlu0 %772, %v703
    %v774 = vpop.permute.xlu0 %773
    %777 = vset.pattern.permute.xlu0 0
    %778 = vperm.xlu0 %777, %v704
    %v779 = vpop.permute.xlu0 %778
    %782 = vset.pattern.permute.xlu0 0
    %783 = vperm.xlu0 %782, %v705
    %v784 = vpop.permute.xlu0 %783
    %787 = vset.pattern.permute.xlu0 0
    %788 = vperm.xlu0 %787, %v706
    %v789 = vpop.permute.xlu0 %788
    %792 = vset.pattern.permute.xlu0 0
    %793 = vperm.xlu0 %792, %v707
    %v794 = vpop.permute.xlu0 %793
    %797 = vset.pattern.permute.xlu0 0
    %798 = vperm.xlu0 %797, %v708
    %v799 = vpop.permute.xlu0 %798
    %802 = vset.pattern.permute.xlu0 0
    %803 = vperm.xlu0 %802, %v709
    %v804 = vpop.permute.xlu0 %803
    %807 = vset.pattern.permute.xlu0 0
    %808 = vperm.xlu0 %807, %v710
    %v809 = vpop.permute.xlu0 %808
    %812 = vset.pattern.permute.xlu0 0
    %813 = vperm.xlu0 %812, %v711
    %v814 = vpop.permute.xlu0 %813
    %817 = vset.pattern.permute.xlu0 0
    %818 = vperm.xlu0 %817, %v712
    %v819 = vpop.permute.xlu0 %818
    %822 = vset.pattern.permute.xlu0 0
    %823 = vperm.xlu0 %822, %v713
    %v824 = vpop.permute.xlu0 %823
    %827 = vset.pattern.permute.xlu0 0
    %828 = vperm.xlu0 %827, %v714
    %v829 = vpop.permute.xlu0 %828
    %832 = vset.pattern.permute.xlu0 0
    %833 = vperm.xlu0 %832, %v715
    %v834 = vpop.permute.xlu0 %833
    %837 = vset.pattern.permute.xlu0 0
    %838 = vperm.xlu0 %837, %v716
    %v839 = vpop.permute.xlu0 %838
    %842 = vset.pattern.permute.xlu0 0
    %843 = vperm.xlu0 %842, %v717
    %v844 = vpop.permute.xlu0 %843
    %847 = vset.pattern.permute.xlu0 0
    %848 = vperm.xlu0 %847, %v718
    %v849 = vpop.permute.xlu0 %848
    %852 = vset.pattern.permute.xlu0 0
    %853 = vperm.xlu0 %852, %v719
    %v854 = vpop.permute.xlu0 %853
    %857 = vset.pattern.permute.xlu0 0
    %858 = vperm.xlu0 %857, %v720
    %v859 = vpop.permute.xlu0 %858
    %862 = vset.pattern.permute.xlu0 0
    %863 = vperm.xlu0 %862, %v721
    %v864 = vpop.permute.xlu0 %863
    %867 = vset.pattern.permute.xlu0 0
    %868 = vperm.xlu0 %867, %v722
    %v869 = vpop.permute.xlu0 %868
    %872 = vset.pattern.permute.xlu0 0
    %873 = vperm.xlu0 %872, %v723
    %v874 = vpop.permute.xlu0 %873
    %877 = vset.pattern.permute.xlu0 0
    %878 = vperm.xlu0 %877, %v724
    %v879 = vpop.permute.xlu0 %878
    %882 = vset.pattern.permute.xlu0 0
    %883 = vperm.xlu0 %882, %v725
    %v884 = vpop.permute.xlu0 %883
    %v886 = vadd.f32 %v598, %v729
    %v887 = vadd.f32 %v599, %v729
    %v888 = vadd.f32 %v600, %v729
    %v889 = vadd.f32 %v601, %v734
    %v890 = vadd.f32 %v602, %v734
    %v891 = vadd.f32 %v603, %v734
    %v892 = vadd.f32 %v604, %v739
    %v893 = vadd.f32 %v605, %v739
    %v894 = vadd.f32 %v606, %v739
    %v895 = vadd.f32 %v607, %v744
    %v896 = vadd.f32 %v608, %v744
    %v897 = vadd.f32 %v609, %v744
    %v898 = vadd.f32 %v610, %v749
    %v899 = vadd.f32 %v611, %v749
    %v900 = vadd.f32 %v612, %v749
    %v901 = vadd.f32 %v613, %v754
    %v902 = vadd.f32 %v614, %v754
    %v903 = vadd.f32 %v615, %v754
    %v904 = vadd.f32 %v616, %v759
    %v905 = vadd.f32 %v617, %v759
    %v906 = vadd.f32 %v618, %v759
    %v907 = vadd.f32 %v619, %v764
    %v908 = vadd.f32 %v620, %v764
    %v909 = vadd.f32 %v621, %v764
    %v910 = vadd.f32 %v622, %v769
    %v911 = vadd.f32 %v623, %v769
    %v912 = vadd.f32 %v624, %v769
    %v913 = vadd.f32 %v625, %v774
    %v914 = vadd.f32 %v626, %v774
    %v915 = vadd.f32 %v627, %v774
    %v916 = vadd.f32 %v628, %v779
    %v917 = vadd.f32 %v629, %v779
    %v918 = vadd.f32 %v630, %v779
    %v919 = vadd.f32 %v631, %v784
    %v920 = vadd.f32 %v632, %v784
    %v921 = vadd.f32 %v633, %v784
    %v922 = vadd.f32 %v634, %v789
    %v923 = vadd.f32 %v635, %v789
    %v924 = vadd.f32 %v636, %v789
    %v925 = vadd.f32 %v637, %v794
    %v926 = vadd.f32 %v638, %v794
    %v927 = vadd.f32 %v639, %v794
    %v928 = vadd.f32 %v640, %v799
    %v929 = vadd.f32 %v641, %v799
    %v930 = vadd.f32 %v642, %v799
    %v931 = vadd.f32 %v643, %v804
    %v932 = vadd.f32 %v644, %v804
    %v933 = vadd.f32 %v645, %v804
    %v934 = vadd.f32 %v646, %v809
    %v935 = vadd.f32 %v647, %v809
    %v936 = vadd.f32 %v648, %v809
    %v937 = vadd.f32 %v649, %v814
    %v938 = vadd.f32 %v650, %v814
    %v939 = vadd.f32 %v651, %v814
    %v940 = vadd.f32 %v652, %v819
    %v941 = vadd.f32 %v653, %v819
    %v942 = vadd.f32 %v654, %v819
    %v943 = vadd.f32 %v655, %v824
    %v944 = vadd.f32 %v656, %v824
    %v945 = vadd.f32 %v657, %v824
    %v946 = vadd.f32 %v658, %v829
    %v947 = vadd.f32 %v659, %v829
    %v948 = vadd.f32 %v660, %v829
    %v949 = vadd.f32 %v661, %v834
    %v950 = vadd.f32 %v662, %v834
    %v951 = vadd.f32 %v663, %v834
    %v952 = vadd.f32 %v664, %v839
    %v953 = vadd.f32 %v665, %v839
    %v954 = vadd.f32 %v666, %v839
    %v955 = vadd.f32 %v667, %v844
    %v956 = vadd.f32 %v668, %v844
    %v957 = vadd.f32 %v669, %v844
    %v958 = vadd.f32 %v670, %v849
    %v959 = vadd.f32 %v671, %v849
    %v960 = vadd.f32 %v672, %v849
    %v961 = vadd.f32 %v673, %v854
    %v962 = vadd.f32 %v674, %v854
    %v963 = vadd.f32 %v675, %v854
    %v964 = vadd.f32 %v676, %v859
    %v965 = vadd.f32 %v677, %v859
    %v966 = vadd.f32 %v678, %v859
    %v967 = vadd.f32 %v679, %v864
    %v968 = vadd.f32 %v680, %v864
    %v969 = vadd.f32 %v681, %v864
    %v970 = vadd.f32 %v682, %v869
    %v971 = vadd.f32 %v683, %v869
    %v972 = vadd.f32 %v684, %v869
    %v973 = vadd.f32 %v685, %v874
    %v974 = vadd.f32 %v686, %v874
    %v975 = vadd.f32 %v687, %v874
    %v976 = vadd.f32 %v688, %v879
    %v977 = vadd.f32 %v689, %v879
    %v978 = vadd.f32 %v690, %v879
    %v979 = vadd.f32 %v691, %v884
    %v980 = vadd.f32 %v692, %v884
    %v981 = vadd.f32 %v693, %v884
    %v982 = vmul.f32 %v886, 0.2
    %v983 = vmul.f32 %v887, 0.2
    %v984 = vmul.f32 %v888, 0.2
    %v985 = vmul.f32 %v889, 0.2
    %v986 = vmul.f32 %v890, 0.2
    %v987 = vmul.f32 %v891, 0.2
    %v988 = vmul.f32 %v892, 0.2
    %v989 = vmul.f32 %v893, 0.2
    %v990 = vmul.f32 %v894, 0.2
    %v991 = vmul.f32 %v895, 0.2
    %v992 = vmul.f32 %v896, 0.2
    %v993 = vmul.f32 %v897, 0.2
    %v994 = vmul.f32 %v898, 0.2
    %v995 = vmul.f32 %v899, 0.2
    %v996 = vmul.f32 %v900, 0.2
    %v997 = vmul.f32 %v901, 0.2
    %v998 = vmul.f32 %v902, 0.2
    %v999 = vmul.f32 %v903, 0.2
    %v1000 = vmul.f32 %v904, 0.2
    %v1001 = vmul.f32 %v905, 0.2
    %v1002 = vmul.f32 %v906, 0.2
    %v1003 = vmul.f32 %v907, 0.2
    %v1004 = vmul.f32 %v908, 0.2
    %v1005 = vmul.f32 %v909, 0.2
    %v1006 = vmul.f32 %v910, 0.2
    %v1007 = vmul.f32 %v911, 0.2
    %v1008 = vmul.f32 %v912, 0.2
    %v1009 = vmul.f32 %v913, 0.2
    %v1010 = vmul.f32 %v914, 0.2
    %v1011 = vmul.f32 %v915, 0.2
    %v1012 = vmul.f32 %v916, 0.2
    %v1013 = vmul.f32 %v917, 0.2
    %v1014 = vmul.f32 %v918, 0.2
    %v1015 = vmul.f32 %v919, 0.2
    %v1016 = vmul.f32 %v920, 0.2
    %v1017 = vmul.f32 %v921, 0.2
    %v1018 = vmul.f32 %v922, 0.2
    %v1019 = vmul.f32 %v923, 0.2
    %v1020 = vmul.f32 %v924, 0.2
    %v1021 = vmul.f32 %v925, 0.2
    %v1022 = vmul.f32 %v926, 0.2
    %v1023 = vmul.f32 %v927, 0.2
    %v1024 = vmul.f32 %v928, 0.2
    %v1025 = vmul.f32 %v929, 0.2
    %v1026 = vmul.f32 %v930, 0.2
    %v1027 = vmul.f32 %v931, 0.2
    %v1028 = vmul.f32 %v932, 0.2
    %v1029 = vmul.f32 %v933, 0.2
    %v1030 = vmul.f32 %v934, 0.2
    %v1031 = vmul.f32 %v935, 0.2
    %v1032 = vmul.f32 %v936, 0.2
    %v1033 = vmul.f32 %v937, 0.2
    %v1034 = vmul.f32 %v938, 0.2
    %v1035 = vmul.f32 %v939, 0.2
    %v1036 = vmul.f32 %v940, 0.2
    %v1037 = vmul.f32 %v941, 0.2
    %v1038 = vmul.f32 %v942, 0.2
    %v1039 = vmul.f32 %v943, 0.2
    %v1040 = vmul.f32 %v944, 0.2
    %v1041 = vmul.f32 %v945, 0.2
    %v1042 = vmul.f32 %v946, 0.2
    %v1043 = vmul.f32 %v947, 0.2
    %v1044 = vmul.f32 %v948, 0.2
    %v1045 = vmul.f32 %v949, 0.2
    %v1046 = vmul.f32 %v950, 0.2
    %v1047 = vmul.f32 %v951, 0.2
    %v1048 = vmul.f32 %v952, 0.2
    %v1049 = vmul.f32 %v953, 0.2
    %v1050 = vmul.f32 %v954, 0.2
    %v1051 = vmul.f32 %v955, 0.2
    %v1052 = vmul.f32 %v956, 0.2
    %v1053 = vmul.f32 %v957, 0.2
    %v1054 = vmul.f32 %v958, 0.2
    %v1055 = vmul.f32 %v959, 0.2
    %v1056 = vmul.f32 %v960, 0.2
    %v1057 = vmul.f32 %v961, 0.2
    %v1058 = vmul.f32 %v962, 0.2
    %v1059 = vmul.f32 %v963, 0.2
    %v1060 = vmul.f32 %v964, 0.2
    %v1061 = vmul.f32 %v965, 0.2
    %v1062 = vmul.f32 %v966, 0.2
    %v1063 = vmul.f32 %v967, 0.2
    %v1064 = vmul.f32 %v968, 0.2
    %v1065 = vmul.f32 %v969, 0.2
    %v1066 = vmul.f32 %v970, 0.2
    %v1067 = vmul.f32 %v971, 0.2
    %v1068 = vmul.f32 %v972, 0.2
    %v1069 = vmul.f32 %v973, 0.2
    %v1070 = vmul.f32 %v974, 0.2
    %v1071 = vmul.f32 %v975, 0.2
    %v1072 = vmul.f32 %v976, 0.2
    %v1073 = vmul.f32 %v977, 0.2
    %v1074 = vmul.f32 %v978, 0.2
    %v1075 = vmul.f32 %v979, 0.2
    %v1076 = vmul.f32 %v980, 0.2
    %v1077 = vmul.f32 %v981, 0.2
    %v1078 = vmax.f32 %v886, %v982
    %v1079 = vmax.f32 %v887, %v983
    %v1080 = vmax.f32 %v888, %v984
    %v1081 = vmax.f32 %v889, %v985
    %v1082 = vmax.f32 %v890, %v986
    %v1083 = vmax.f32 %v891, %v987
    %v1084 = vmax.f32 %v892, %v988
    %v1085 = vmax.f32 %v893, %v989
    %v1086 = vmax.f32 %v894, %v990
    %v1087 = vmax.f32 %v895, %v991
    %v1088 = vmax.f32 %v896, %v992
    %v1089 = vmax.f32 %v897, %v993
    %v1090 = vmax.f32 %v898, %v994
    %v1091 = vmax.f32 %v899, %v995
    %v1092 = vmax.f32 %v900, %v996
    %v1093 = vmax.f32 %v901, %v997
    %v1094 = vmax.f32 %v902, %v998
    %v1095 = vmax.f32 %v903, %v999
    %v1096 = vmax.f32 %v904, %v1000
    %v1097 = vmax.f32 %v905, %v1001
    %v1098 = vmax.f32 %v906, %v1002
    %v1099 = vmax.f32 %v907, %v1003
    %v1100 = vmax.f32 %v908, %v1004
    %v1101 = vmax.f32 %v909, %v1005
    %v1102 = vmax.f32 %v910, %v1006
    %v1103 = vmax.f32 %v911, %v1007
    %v1104 = vmax.f32 %v912, %v1008
    %v1105 = vmax.f32 %v913, %v1009
    %v1106 = vmax.f32 %v914, %v1010
    %v1107 = vmax.f32 %v915, %v1011
    %v1108 = vmax.f32 %v916, %v1012
    %v1109 = vmax.f32 %v917, %v1013
    %v1110 = vmax.f32 %v918, %v1014
    %v1111 = vmax.f32 %v919, %v1015
    %v1112 = vmax.f32 %v920, %v1016
    %v1113 = vmax.f32 %v921, %v1017
    %v1114 = vmax.f32 %v922, %v1018
    %v1115 = vmax.f32 %v923, %v1019
    %v1116 = vmax.f32 %v924, %v1020
    %v1117 = vmax.f32 %v925, %v1021
    %v1118 = vmax.f32 %v926, %v1022
    %v1119 = vmax.f32 %v927, %v1023
    %v1120 = vmax.f32 %v928, %v1024
    %v1121 = vmax.f32 %v929, %v1025
    %v1122 = vmax.f32 %v930, %v1026
    %v1123 = vmax.f32 %v931, %v1027
    %v1124 = vmax.f32 %v932, %v1028
    %v1125 = vmax.f32 %v933, %v1029
    %v1126 = vmax.f32 %v934, %v1030
    %v1127 = vmax.f32 %v935, %v1031
    %v1128 = vmax.f32 %v936, %v1032
    %v1129 = vmax.f32 %v937, %v1033
    %v1130 = vmax.f32 %v938, %v1034
    %v1131 = vmax.f32 %v939, %v1035
    %v1132 = vmax.f32 %v940, %v1036
    %v1133 = vmax.f32 %v941, %v1037
    %v1134 = vmax.f32 %v942, %v1038
    %v1135 = vmax.f32 %v943, %v1039
    %v1136 = vmax.f32 %v944, %v1040
    %v1137 = vmax.f32 %v945, %v1041
    %v1138 = vmax.f32 %v946, %v1042
    %v1139 = vmax.f32 %v947, %v1043
    %v1140 = vmax.f32 %v948, %v1044
    %v1141 = vmax.f32 %v949, %v1045
    %v1142 = vmax.f32 %v950, %v1046
    %v1143 = vmax.f32 %v951, %v1047
    %v1144 = vmax.f32 %v952, %v1048
    %v1145 = vmax.f32 %v953, %v1049
    %v1146 = vmax.f32 %v954, %v1050
    %v1147 = vmax.f32 %v955, %v1051
    %v1148 = vmax.f32 %v956, %v1052
    %v1149 = vmax.f32 %v957, %v1053
    %v1150 = vmax.f32 %v958, %v1054
    %v1151 = vmax.f32 %v959, %v1055
    %v1152 = vmax.f32 %v960, %v1056
    %v1153 = vmax.f32 %v961, %v1057
    %v1154 = vmax.f32 %v962, %v1058
    %v1155 = vmax.f32 %v963, %v1059
    %v1156 = vmax.f32 %v964, %v1060
    %v1157 = vmax.f32 %v965, %v1061
    %v1158 = vmax.f32 %v966, %v1062
    %v1159 = vmax.f32 %v967, %v1063
    %v1160 = vmax.f32 %v968, %v1064
    %v1161 = vmax.f32 %v969, %v1065
    %v1162 = vmax.f32 %v970, %v1066
    %v1163 = vmax.f32 %v971, %v1067
    %v1164 = vmax.f32 %v972, %v1068
    %v1165 = vmax.f32 %v973, %v1069
    %v1166 = vmax.f32 %v974, %v1070
    %v1167 = vmax.f32 %v975, %v1071
    %v1168 = vmax.f32 %v976, %v1072
    %v1169 = vmax.f32 %v977, %v1073
    %v1170 = vmax.f32 %v978, %v1074
    %v1171 = vmax.f32 %v979, %v1075
    %v1172 = vmax.f32 %v980, %v1076
    %v1173 = vmax.f32 %v981, %v1077
    %v1174 = vld [vmem:[%s3] sm:$0xff]
    %v1175 = vld [vmem:[%s3 + $0x8] sm:$0xff]
    %v1176 = vld [vmem:[%s3 + $0x10] sm:$0xff]
    %v1177 = vld [vmem:[%s3 + $0x18] sm:$0xff]
    %v1178 = vld [vmem:[%s3 + $0x20] sm:$0xff]
    %v1179 = vld [vmem:[%s3 + $0x28] sm:$0xff]
    %v1180 = vld [vmem:[%s3 + $0x30] sm:$0xff]
    %v1181 = vld [vmem:[%s3 + $0x38] sm:$0xff]
    %v1182 = vld [vmem:[%s3 + $0x40] sm:$0xff]
    %v1183 = vld [vmem:[%s3 + $0x48] sm:$0xff]
    %v1184 = vld [vmem:[%s3 + $0x50] sm:$0xff]
    %v1185 = vld [vmem:[%s3 + $0x58] sm:$0xff]
    %v1186 = vld [vmem:[%s3 + $0x60] sm:$0xff]
    %v1187 = vld [vmem:[%s3 + $0x68] sm:$0xff]
    %v1188 = vld [vmem:[%s3 + $0x70] sm:$0xff]
    %v1189 = vld [vmem:[%s3 + $0x78] sm:$0xff]
    %v1190 = vpack.c.bf16 %v1081, %v1078
    %v1191 = vpack.c.bf16 %v1082, %v1079
    %v1192 = vpack.c.bf16 %v1083, %v1080
    %v1193 = vpack.c.bf16 %v1087, %v1084
    %v1194 = vpack.c.bf16 %v1088, %v1085
    %v1195 = vpack.c.bf16 %v1089, %v1086
    %v1196 = vpack.c.bf16 %v1093, %v1090
    %v1197 = vpack.c.bf16 %v1094, %v1091
    %v1198 = vpack.c.bf16 %v1095, %v1092
    %v1199 = vpack.c.bf16 %v1099, %v1096
    %v1200 = vpack.c.bf16 %v1100, %v1097
    %v1201 = vpack.c.bf16 %v1101, %v1098
    %v1202 = vpack.c.bf16 %v1105, %v1102
    %v1203 = vpack.c.bf16 %v1106, %v1103
    %v1204 = vpack.c.bf16 %v1107, %v1104
    %v1205 = vpack.c.bf16 %v1111, %v1108
    %v1206 = vpack.c.bf16 %v1112, %v1109
    %v1207 = vpack.c.bf16 %v1113, %v1110
    %v1208 = vpack.c.bf16 %v1117, %v1114
    %v1209 = vpack.c.bf16 %v1118, %v1115
    %v1210 = vpack.c.bf16 %v1119, %v1116
    %v1211 = vpack.c.bf16 %v1123, %v1120
    %v1212 = vpack.c.bf16 %v1124, %v1121
    %v1213 = vpack.c.bf16 %v1125, %v1122
    %v1214 = vpack.c.bf16 %v1129, %v1126
    %v1215 = vpack.c.bf16 %v1130, %v1127
    %v1216 = vpack.c.bf16 %v1131, %v1128
    %v1217 = vpack.c.bf16 %v1135, %v1132
    %v1218 = vpack.c.bf16 %v1136, %v1133
    %v1219 = vpack.c.bf16 %v1137, %v1134
    %v1220 = vpack.c.bf16 %v1141, %v1138
    %v1221 = vpack.c.bf16 %v1142, %v1139
    %v1222 = vpack.c.bf16 %v1143, %v1140
    %v1223 = vpack.c.bf16 %v1147, %v1144
    %v1224 = vpack.c.bf16 %v1148, %v1145
    %v1225 = vpack.c.bf16 %v1149, %v1146
    %v1226 = vpack.c.bf16 %v1153, %v1150
    %v1227 = vpack.c.bf16 %v1154, %v1151
    %v1228 = vpack.c.bf16 %v1155, %v1152
    %v1229 = vpack.c.bf16 %v1159, %v1156
    %v1230 = vpack.c.bf16 %v1160, %v1157
    %v1231 = vpack.c.bf16 %v1161, %v1158
    %v1232 = vpack.c.bf16 %v1165, %v1162
    %v1233 = vpack.c.bf16 %v1166, %v1163
    %v1234 = vpack.c.bf16 %v1167, %v1164
    %v1235 = vpack.c.bf16 %v1171, %v1168
    %v1236 = vpack.c.bf16 %v1172, %v1169
    %v1237 = vpack.c.bf16 %v1173, %v1170
    %v1238 = vld [vmem:[%s4] sm:$0xff]
    %v1239 = vld [vmem:[%s4 + $0x8] sm:$0xff]
    %v1240 = vld [vmem:[%s4 + $0x10] sm:$0xff]
    %v1241 = vld [vmem:[%s4 + $0x18] sm:$0xff]
    %v1242 = vld [vmem:[%s4 + $0x20] sm:$0xff]
    %v1243 = vld [vmem:[%s4 + $0x28] sm:$0xff]
    %v1244 = vld [vmem:[%s4 + $0x30] sm:$0xff]
    %v1245 = vld [vmem:[%s4 + $0x38] sm:$0xff]
    %v1246 = vld [vmem:[%s4 + $0x40] sm:$0xff]
    %v1247 = vld [vmem:[%s4 + $0x48] sm:$0xff]
    %v1248 = vld [vmem:[%s4 + $0x50] sm:$0xff]
    %v1249 = vld [vmem:[%s4 + $0x58] sm:$0xff]
    %v1250 = vld [vmem:[%s4 + $0x60] sm:$0xff]
    %v1251 = vld [vmem:[%s4 + $0x68] sm:$0xff]
    %v1252 = vld [vmem:[%s4 + $0x70] sm:$0xff]
    %v1253 = vld [vmem:[%s4 + $0x78] sm:$0xff]
    %1255 = vset.pattern.permute.xlu0 0
    %1256 = vperm.xlu0 %1255, %v1238
    %v1257 = vpop.permute.xlu0 %1256
    %1260 = vset.pattern.permute.xlu0 0
    %1261 = vperm.xlu0 %1260, %v1239
    %v1262 = vpop.permute.xlu0 %1261
    %1265 = vset.pattern.permute.xlu0 0
    %1266 = vperm.xlu0 %1265, %v1240
    %v1267 = vpop.permute.xlu0 %1266
    %1270 = vset.pattern.permute.xlu0 0
    %1271 = vperm.xlu0 %1270, %v1241
    %v1272 = vpop.permute.xlu0 %1271
    %1275 = vset.pattern.permute.xlu0 0
    %1276 = vperm.xlu0 %1275, %v1242
    %v1277 = vpop.permute.xlu0 %1276
    %1280 = vset.pattern.permute.xlu0 0
    %1281 = vperm.xlu0 %1280, %v1243
    %v1282 = vpop.permute.xlu0 %1281
    %1285 = vset.pattern.permute.xlu0 0
    %1286 = vperm.xlu0 %1285, %v1244
    %v1287 = vpop.permute.xlu0 %1286
    %1290 = vset.pattern.permute.xlu0 0
    %1291 = vperm.xlu0 %1290, %v1245
    %v1292 = vpop.permute.xlu0 %1291
    %1295 = vset.pattern.permute.xlu0 0
    %1296 = vperm.xlu0 %1295, %v1246
    %v1297 = vpop.permute.xlu0 %1296
    %1300 = vset.pattern.permute.xlu0 0
    %1301 = vperm.xlu0 %1300, %v1247
    %v1302 = vpop.permute.xlu0 %1301
    %1305 = vset.pattern.permute.xlu0 0
    %1306 = vperm.xlu0 %1305, %v1248
    %v1307 = vpop.permute.xlu0 %1306
    %1310 = vset.pattern.permute.xlu0 0
    %1311 = vperm.xlu0 %1310, %v1249
    %v1312 = vpop.permute.xlu0 %1311
    %1315 = vset.pattern.permute.xlu0 0
    %1316 = vperm.xlu0 %1315, %v1250
    %v1317 = vpop.permute.xlu0 %1316
    %1320 = vset.pattern.permute.xlu0 0
    %1321 = vperm.xlu0 %1320, %v1251
    %v1322 = vpop.permute.xlu0 %1321
    %1325 = vset.pattern.permute.xlu0 0
    %1326 = vperm.xlu0 %1325, %v1252
    %v1327 = vpop.permute.xlu0 %1326
    %1330 = vset.pattern.permute.xlu0 0
    %1331 = vperm.xlu0 %1330, %v1253
    %v1332 = vpop.permute.xlu0 %1331
    %v1350 = vunpack.c.l.b16 %v1174
    %v1351 = vunpack.c.h.b16 %v1174
    %v1352 = vunpack.c.l.b16 %v1175
    %v1353 = vunpack.c.h.b16 %v1175
    %v1354 = vunpack.c.l.b16 %v1176
    %v1355 = vunpack.c.h.b16 %v1176
    %v1356 = vunpack.c.l.b16 %v1177
    %v1357 = vunpack.c.h.b16 %v1177
    %v1358 = vunpack.c.l.b16 %v1178
    %v1359 = vunpack.c.h.b16 %v1178
    %v1360 = vunpack.c.l.b16 %v1179
    %v1361 = vunpack.c.h.b16 %v1179
    %v1362 = vunpack.c.l.b16 %v1180
    %v1363 = vunpack.c.h.b16 %v1180
    %v1364 = vunpack.c.l.b16 %v1181
    %v1365 = vunpack.c.h.b16 %v1181
    %v1366 = vunpack.c.l.b16 %v1182
    %v1367 = vunpack.c.h.b16 %v1182
    %v1368 = vunpack.c.l.b16 %v1183
    %v1369 = vunpack.c.h.b16 %v1183
    %v1370 = vunpack.c.l.b16 %v1184
    %v1371 = vunpack.c.h.b16 %v1184
    %v1372 = vunpack.c.l.b16 %v1185
    %v1373 = vunpack.c.h.b16 %v1185
    %v1374 = vunpack.c.l.b16 %v1186
    %v1375 = vunpack.c.h.b16 %v1186
    %v1376 = vunpack.c.l.b16 %v1187
    %v1377 = vunpack.c.h.b16 %v1187
    %v1378 = vunpack.c.l.b16 %v1188
    %v1379 = vunpack.c.h.b16 %v1188
    %v1380 = vunpack.c.l.b16 %v1189
    %v1381 = vunpack.c.h.b16 %v1189
    %v1382 = vpack.c.b16 %v1352, %v1350
    %v1383 = vpack.c.b16 %v1353, %v1351
    %v1384 = vpack.c.b16 %v1356, %v1354
    %v1385 = vpack.c.b16 %v1357, %v1355
    %v1386 = vpack.c.b16 %v1360, %v1358
    %v1387 = vpack.c.b16 %v1361, %v1359
    %v1388 = vpack.c.b16 %v1364, %v1362
    %v1389 = vpack.c.b16 %v1365, %v1363
    %v1390 = vpack.c.b16 %v1368, %v1366
    %v1391 = vpack.c.b16 %v1369, %v1367
    %v1392 = vpack.c.b16 %v1372, %v1370
    %v1393 = vpack.c.b16 %v1373, %v1371
    %v1394 = vpack.c.b16 %v1376, %v1374
    %v1395 = vpack.c.b16 %v1377, %v1375
    %v1396 = vpack.c.b16 %v1380, %v1378
    %v1397 = vpack.c.b16 %v1381, %v1379
    %1414 = vmatprep.subr.bf16.mxu0 %v1191
    %1415 = vmatpush1.bf16.msra.mxu0 %v1190
    %1416 = vmatprep.subr.bf16.mxu0 %v1194
    %1417 = vmatpush1.bf16.msra.mxu0 %v1193
    %1418 = vmatprep.subr.bf16.mxu0 %v1197
    %1419 = vmatpush1.bf16.msra.mxu0 %v1196
    %1420 = vmatprep.subr.bf16.mxu0 %v1200
    %1421 = vmatpush1.bf16.msra.mxu0 %v1199
    %1422 = vmatprep.subr.bf16.mxu0 %v1203
    %1423 = vmatpush1.bf16.msra.mxu0 %v1202
    %1424 = vmatprep.subr.bf16.mxu0 %v1206
    %1425 = vmatpush1.bf16.msra.mxu0 %v1205
    %1426 = vmatprep.subr.bf16.mxu0 %v1209
    %1427 = vmatpush1.bf16.msra.mxu0 %v1208
    %1428 = vmatprep.subr.bf16.mxu0 %v1212
    %1429 = vmatpush1.bf16.msra.mxu0 %v1211
    %1430 = vmatprep.subr.bf16.mxu0 %v1215
    %1431 = vmatpush1.bf16.msra.mxu0 %v1214
    %1432 = vmatprep.subr.bf16.mxu0 %v1218
    %1433 = vmatpush1.bf16.msra.mxu0 %v1217
    %1434 = vmatprep.subr.bf16.mxu0 %v1221
    %1435 = vmatpush1.bf16.msra.mxu0 %v1220
    %1436 = vmatprep.subr.bf16.mxu0 %v1224
    %1437 = vmatpush1.bf16.msra.mxu0 %v1223
    %1438 = vmatprep.subr.bf16.mxu0 %v1227
    %1439 = vmatpush1.bf16.msra.mxu0 %v1226
    %1440 = vmatprep.subr.bf16.mxu0 %v1230
    %1441 = vmatpush1.bf16.msra.mxu0 %v1229
    %1442 = vmatprep.subr.bf16.mxu0 %v1233
    %1443 = vmatpush1.bf16.msra.mxu0 %v1232
    %1444 = vmatprep.subr.bf16.mxu0 %v1236
    %1445 = vmatpush1.bf16.msra.mxu0 %v1235
    %1446 = vmatprep.mubr.bf16.mxu0 %v1383
    %1447 = vmatmul.mubr.bf16.gmra.mrb[0].mxu0 %v1382
    %v1448 = vpop.f32.mrb[0].mxu0
    %v1449 = vadd.f32 %v1257, %v1448
    %v1450 = vpop.f32.mrb[0].mxu0
    %v1451 = vadd.f32 %v1257, %v1450
    %v1452 = vpop.f32.mrb[0].mxu0
    %v1453 = vadd.f32 %v1262, %v1452
    %v1454 = vpop.f32.mrb[0].mxu0
    %v1455 = vadd.f32 %v1262, %v1454
    %1456 = vmatprep.mubr.bf16.mxu0 %v1385
    %1457 = vmatmul.mubr.bf16.gmra.mrb[0].mxu0 %v1384
    %v1458 = vpop.f32.mrb[0].mxu0
    %v1459 = vadd.f32 %v1267, %v1458
    %v1460 = vpop.f32.mrb[0].mxu0
    %v1461 = vadd.f32 %v1267, %v1460
    %v1462 = vpop.f32.mrb[0].mxu0
    %v1463 = vadd.f32 %v1272, %v1462
    %v1464 = vpop.f32.mrb[0].mxu0
    %v1465 = vadd.f32 %v1272, %v1464
    %1466 = vmatprep.mubr.bf16.mxu0 %v1387
    %1467 = vmatmul.mubr.bf16.gmra.mrb[0].mxu0 %v1386
    %v1468 = vpop.f32.mrb[0].mxu0
    %v1469 = vadd.f32 %v1277, %v1468
    %v1470 = vpop.f32.mrb[0].mxu0
    %v1471 = vadd.f32 %v1277, %v1470
    %v1472 = vpop.f32.mrb[0].mxu0
    %v1473 = vadd.f32 %v1282, %v1472
    %v1474 = vpop.f32.mrb[0].mxu0
    %v1475 = vadd.f32 %v1282, %v1474
    %1476 = vmatprep.mubr.bf16.mxu0 %v1389
    %1477 = vmatmul.mubr.bf16.gmra.mrb[0].mxu0 %v1388
    %v1478 = vpop.f32.mrb[0].mxu0
    %v1479 = vadd.f32 %v1287, %v1478
    %v1480 = vpop.f32.mrb[0].mxu0
    %v1481 = vadd.f32 %v1287, %v1480
    %v1482 = vpop.f32.mrb[0].mxu0
    %v1483 = vadd.f32 %v1292, %v1482
    %v1484 = vpop.f32.mrb[0].mxu0
    %v1485 = vadd.f32 %v1292, %v1484
    %1486 = vmatprep.mubr.bf16.mxu0 %v1391
    %1487 = vmatmul.mubr.bf16.gmra.mrb[0].mxu0 %v1390
    %v1488 = vpop.f32.mrb[0].mxu0
    %v1489 = vadd.f32 %v1297, %v1488
    %v1490 = vpop.f32.mrb[0].mxu0
    %v1491 = vadd.f32 %v1297, %v1490
    %v1492 = vpop.f32.mrb[0].mxu0
    %v1493 = vadd.f32 %v1302, %v1492
    %v1494 = vpop.f32.mrb[0].mxu0
    %v1495 = vadd.f32 %v1302, %v1494
    %1496 = vmatprep.mubr.bf16.mxu0 %v1393
    %1497 = vmatmul.mubr.bf16.gmra.mrb[0].mxu0 %v1392
    %v1498 = vpop.f32.mrb[0].mxu0
    %v1499 = vadd.f32 %v1307, %v1498
    %v1500 = vpop.f32.mrb[0].mxu0
    %v1501 = vadd.f32 %v1307, %v1500
    %v1502 = vpop.f32.mrb[0].mxu0
    %v1503 = vadd.f32 %v1312, %v1502
    %v1504 = vpop.f32.mrb[0].mxu0
    %v1505 = vadd.f32 %v1312, %v1504
    %1506 = vmatprep.mubr.bf16.mxu0 %v1395
    %1507 = vmatmul.mubr.bf16.gmra.mrb[0].mxu0 %v1394
    %v1508 = vpop.f32.mrb[0].mxu0
    %v1509 = vadd.f32 %v1317, %v1508
    %v1510 = vpop.f32.mrb[0].mxu0
    %v1511 = vadd.f32 %v1317, %v1510
    %v1512 = vpop.f32.mrb[0].mxu0
    %v1513 = vadd.f32 %v1322, %v1512
    %v1514 = vpop.f32.mrb[0].mxu0
    %v1515 = vadd.f32 %v1322, %v1514
    %1516 = vmatprep.mubr.bf16.mxu0 %v1397
    %1517 = vmatmul.mubr.bf16.gmra.mrb[0].mxu0 %v1396
    %v1518 = vpop.f32.mrb[0].mxu0
    %v1519 = vadd.f32 %v1327, %v1518
    %v1520 = vpop.f32.mrb[0].mxu0
    %v1521 = vadd.f32 %v1327, %v1520
    %v1522 = vpop.f32.mrb[0].mxu0
    %v1523 = vadd.f32 %v1332, %v1522
    %v1524 = vpop.f32.mrb[0].mxu0
    %v1525 = vadd.f32 %v1332, %v1524
    %1526 = vdwg.mxu0
    %1527 = vmatprep.subr.bf16.mxu0 0
    %1528 = vmatpush1.bf16.msra.mxu0 %v1192
    %1529 = vmatprep.subr.bf16.mxu0 0
    %1530 = vmatpush1.bf16.msra.mxu0 %v1195
    %1531 = vmatprep.subr.bf16.mxu0 0
    %1532 = vmatpush1.bf16.msra.mxu0 %v1198
    %1533 = vmatprep.subr.bf16.mxu0 0
    %1534 = vmatpush1.bf16.msra.mxu0 %v1201
    %1535 = vmatprep.subr.bf16.mxu0 0
    %1536 = vmatpush1.bf16.msra.mxu0 %v1204
    %1537 = vmatprep.subr.bf16.mxu0 0
    %1538 = vmatpush1.bf16.msra.mxu0 %v1207
    %1539 = vmatprep.subr.bf16.mxu0 0
    %1540 = vmatpush1.bf16.msra.mxu0 %v1210
    %1541 = vmatprep.subr.bf16.mxu0 0
    %1542 = vmatpush1.bf16.msra.mxu0 %v1213
    %1543 = vmatprep.subr.bf16.mxu0 0
    %1544 = vmatpush1.bf16.msra.mxu0 %v1216
    %1545 = vmatprep.subr.bf16.mxu0 0
    %1546 = vmatpush1.bf16.msra.mxu0 %v1219
    %1547 = vmatprep.subr.bf16.mxu0 0
    %1548 = vmatpush1.bf16.msra.mxu0 %v1222
    %1549 = vmatprep.subr.bf16.mxu0 0
    %1550 = vmatpush1.bf16.msra.mxu0 %v1225
    %1551 = vmatprep.subr.bf16.mxu0 0
    %1552 = vmatpush1.bf16.msra.mxu0 %v1228
    %1553 = vmatprep.subr.bf16.mxu0 0
    %1554 = vmatpush1.bf16.msra.mxu0 %v1231
    %1555 = vmatprep.subr.bf16.mxu0 0
    %1556 = vmatpush1.bf16.msra.mxu0 %v1234
    %1557 = vmatprep.subr.bf16.mxu0 0
    %1558 = vmatpush1.bf16.msra.mxu0 %v1237
    %1559 = vmatprep.mubr.bf16.mxu0 %v1383
    %1560 = vmatmul.mubr.bf16.gmra.mrb[0].mxu0 %v1382
    %v1561 = vpop.f32.mrb[0].mxu0
    %v1562 = vadd.f32 %v1257, %v1561
    %v1563 = vpop.f32.mrb[0].mxu0
    %v1564 = vpop.f32.mrb[0].mxu0
    %v1565 = vadd.f32 %v1262, %v1564
    %v1566 = vpop.f32.mrb[0].mxu0
    %1567 = vmatprep.mubr.bf16.mxu0 %v1385
    %1568 = vmatmul.mubr.bf16.gmra.mrb[0].mxu0 %v1384
    %v1569 = vpop.f32.mrb[0].mxu0
    %v1570 = vadd.f32 %v1267, %v1569
    %v1571 = vpop.f32.mrb[0].mxu0
    %v1572 = vpop.f32.mrb[0].mxu0
    %v1573 = vadd.f32 %v1272, %v1572
    %v1574 = vpop.f32.mrb[0].mxu0
    %1575 = vmatprep.mubr.bf16.mxu0 %v1387
    %1576 = vmatmul.mubr.bf16.gmra.mrb[0].mxu0 %v1386
    %v1577 = vpop.f32.mrb[0].mxu0
    %v1578 = vadd.f32 %v1277, %v1577
    %v1579 = vpop.f32.mrb[0].mxu0
    %v1580 = vpop.f32.mrb[0].mxu0
    %v1581 = vadd.f32 %v1282, %v1580
    %v1582 = vpop.f32.mrb[0].mxu0
    %1583 = vmatprep.mubr.bf16.mxu0 %v1389
    %1584 = vmatmul.mubr.bf16.gmra.mrb[0].mxu0 %v1388
    %v1585 = vpop.f32.mrb[0].mxu0
    %v1586 = vadd.f32 %v1287, %v1585
    %v1587 = vpop.f32.mrb[0].mxu0
    %v1588 = vpop.f32.mrb[0].mxu0
    %v1589 = vadd.f32 %v1292, %v1588
    %v1590 = vpop.f32.mrb[0].mxu0
    %1591 = vmatprep.mubr.bf16.mxu0 %v1391
    %1592 = vmatmul.mubr.bf16.gmra.mrb[0].mxu0 %v1390
    %v1593 = vpop.f32.mrb[0].mxu0
    %v1594 = vadd.f32 %v1297, %v1593
    %v1595 = vpop.f32.mrb[0].mxu0
    %v1596 = vpop.f32.mrb[0].mxu0
    %v1597 = vadd.f32 %v1302, %v1596
    %v1598 = vpop.f32.mrb[0].mxu0
    %1599 = vmatprep.mubr.bf16.mxu0 %v1393
    %1600 = vmatmul.mubr.bf16.gmra.mrb[0].mxu0 %v1392
    %v1601 = vpop.f32.mrb[0].mxu0
    %v1602 = vadd.f32 %v1307, %v1601
    %v1603 = vpop.f32.mrb[0].mxu0
    %v1604 = vpop.f32.mrb[0].mxu0
    %v1605 = vadd.f32 %v1312, %v1604
    %v1606 = vpop.f32.mrb[0].mxu0
    %1607 = vmatprep.mubr.bf16.mxu0 %v1395
    %1608 = vmatmul.mubr.bf16.gmra.mrb[0].mxu0 %v1394
    %v1609 = vpop.f32.mrb[0].mxu0
    %v1610 = vadd.f32 %v1317, %v1609
    %v1611 = vpop.f32.mrb[0].mxu0
    %v1612 = vpop.f32.mrb[0].mxu0
    %v1613 = vadd.f32 %v1322, %v1612
    %v1614 = vpop.f32.mrb[0].mxu0
    %1615 = vmatprep.mubr.bf16.mxu0 %v1397
    %1616 = vmatmul.mubr.bf16.gmra.mrb[0].mxu0 %v1396
    %v1617 = vpop.f32.mrb[0].mxu0
    %v1618 = vadd.f32 %v1327, %v1617
    %v1619 = vpop.f32.mrb[0].mxu0
    %v1620 = vpop.f32.mrb[0].mxu0
    %v1621 = vadd.f32 %v1332, %v1620
    %v1622 = vpop.f32.mrb[0].mxu0
    %1623 = vdwg.mxu0
    %v1624 = vmul.f32 %v1449, 0.2
    %v1625 = vmul.f32 %v1451, 0.2
    %v1626 = vmul.f32 %v1562, 0.2
    %v1627 = vmul.f32 %v1453, 0.2
    %v1628 = vmul.f32 %v1455, 0.2
    %v1629 = vmul.f32 %v1565, 0.2
    %v1630 = vmul.f32 %v1459, 0.2
    %v1631 = vmul.f32 %v1461, 0.2
    %v1632 = vmul.f32 %v1570, 0.2
    %v1633 = vmul.f32 %v1463, 0.2
    %v1634 = vmul.f32 %v1465, 0.2
    %v1635 = vmul.f32 %v1573, 0.2
    %v1636 = vmul.f32 %v1469, 0.2
    %v1637 = vmul.f32 %v1471, 0.2
    %v1638 = vmul.f32 %v1578, 0.2
    %v1639 = vmul.f32 %v1473, 0.2
    %v1640 = vmul.f32 %v1475, 0.2
    %v1641 = vmul.f32 %v1581, 0.2
    %v1642 = vmul.f32 %v1479, 0.2
    %v1643 = vmul.f32 %v1481, 0.2
    %v1644 = vmul.f32 %v1586, 0.2
    %v1645 = vmul.f32 %v1483, 0.2
    %v1646 = vmul.f32 %v1485, 0.2
    %v1647 = vmul.f32 %v1589, 0.2
    %v1648 = vmul.f32 %v1489, 0.2
    %v1649 = vmul.f32 %v1491, 0.2
    %v1650 = vmul.f32 %v1594, 0.2
    %v1651 = vmul.f32 %v1493, 0.2
    %v1652 = vmul.f32 %v1495, 0.2
    %v1653 = vmul.f32 %v1597, 0.2
    %v1654 = vmul.f32 %v1499, 0.2
    %v1655 = vmul.f32 %v1501, 0.2
    %v1656 = vmul.f32 %v1602, 0.2
    %v1657 = vmul.f32 %v1503, 0.2
    %v1658 = vmul.f32 %v1505, 0.2
    %v1659 = vmul.f32 %v1605, 0.2
    %v1660 = vmul.f32 %v1509, 0.2
    %v1661 = vmul.f32 %v1511, 0.2
    %v1662 = vmul.f32 %v1610, 0.2
    %v1663 = vmul.f32 %v1513, 0.2
    %v1664 = vmul.f32 %v1515, 0.2
    %v1665 = vmul.f32 %v1613, 0.2
    %v1666 = vmul.f32 %v1519, 0.2
    %v1667 = vmul.f32 %v1521, 0.2
    %v1668 = vmul.f32 %v1618, 0.2
    %v1669 = vmul.f32 %v1523, 0.2
    %v1670 = vmul.f32 %v1525, 0.2
    %v1671 = vmul.f32 %v1621, 0.2
    %v1672 = vmax.f32 %v1449, %v1624
    %v1673 = vmax.f32 %v1451, %v1625
    %v1674 = vmax.f32 %v1562, %v1626
    %v1675 = vmax.f32 %v1453, %v1627
    %v1676 = vmax.f32 %v1455, %v1628
    %v1677 = vmax.f32 %v1565, %v1629
    %v1678 = vmax.f32 %v1459, %v1630
    %v1679 = vmax.f32 %v1461, %v1631
    %v1680 = vmax.f32 %v1570, %v1632
    %v1681 = vmax.f32 %v1463, %v1633
    %v1682 = vmax.f32 %v1465, %v1634
    %v1683 = vmax.f32 %v1573, %v1635
    %v1684 = vmax.f32 %v1469, %v1636
    %v1685 = vmax.f32 %v1471, %v1637
    %v1686 = vmax.f32 %v1578, %v1638
    %v1687 = vmax.f32 %v1473, %v1639
    %v1688 = vmax.f32 %v1475, %v1640
    %v1689 = vmax.f32 %v1581, %v1641
    %v1690 = vmax.f32 %v1479, %v1642
    %v1691 = vmax.f32 %v1481, %v1643
    %v1692 = vmax.f32 %v1586, %v1644
    %v1693 = vmax.f32 %v1483, %v1645
    %v1694 = vmax.f32 %v1485, %v1646
    %v1695 = vmax.f32 %v1589, %v1647
    %v1696 = vmax.f32 %v1489, %v1648
    %v1697 = vmax.f32 %v1491, %v1649
    %v1698 = vmax.f32 %v1594, %v1650
    %v1699 = vmax.f32 %v1493, %v1651
    %v1700 = vmax.f32 %v1495, %v1652
    %v1701 = vmax.f32 %v1597, %v1653
    %v1702 = vmax.f32 %v1499, %v1654
    %v1703 = vmax.f32 %v1501, %v1655
    %v1704 = vmax.f32 %v1602, %v1656
    %v1705 = vmax.f32 %v1503, %v1657
    %v1706 = vmax.f32 %v1505, %v1658
    %v1707 = vmax.f32 %v1605, %v1659
    %v1708 = vmax.f32 %v1509, %v1660
    %v1709 = vmax.f32 %v1511, %v1661
    %v1710 = vmax.f32 %v1610, %v1662
    %v1711 = vmax.f32 %v1513, %v1663
    %v1712 = vmax.f32 %v1515, %v1664
    %v1713 = vmax.f32 %v1613, %v1665
    %v1714 = vmax.f32 %v1519, %v1666
    %v1715 = vmax.f32 %v1521, %v1667
    %v1716 = vmax.f32 %v1618, %v1668
    %v1717 = vmax.f32 %v1523, %v1669
    %v1718 = vmax.f32 %v1525, %v1670
    %v1719 = vmax.f32 %v1621, %v1671
    %v1720 = vld [vmem:[%s5] sm:$0xff]
    %v1721 = vld [vmem:[%s5 + $0x8] sm:$0xff]
    %v1722 = vld [vmem:[%s5 + $0x10] sm:$0xff]
    %v1723 = vld [vmem:[%s5 + $0x18] sm:$0xff]
    %v1724 = vld [vmem:[%s5 + $0x20] sm:$0xff]
    %v1725 = vld [vmem:[%s5 + $0x28] sm:$0xff]
    %v1726 = vld [vmem:[%s5 + $0x30] sm:$0xff]
    %v1727 = vld [vmem:[%s5 + $0x38] sm:$0xff]
    %v1728 = vld [vmem:[%s5 + $0x40] sm:$0xff]
    %v1729 = vld [vmem:[%s5 + $0x48] sm:$0xff]
    %v1730 = vld [vmem:[%s5 + $0x50] sm:$0xff]
    %v1731 = vld [vmem:[%s5 + $0x58] sm:$0xff]
    %v1732 = vld [vmem:[%s5 + $0x60] sm:$0xff]
    %v1733 = vld [vmem:[%s5 + $0x68] sm:$0xff]
    %v1734 = vld [vmem:[%s5 + $0x70] sm:$0xff]
    %v1735 = vld [vmem:[%s5 + $0x78] sm:$0xff]
    %1737 = vset.pattern.permute.xlu0 0
    %1738 = vperm.xlu0 %1737, %v1720
    %v1739 = vpop.permute.xlu0 %1738
    %1742 = vset.pattern.permute.xlu0 0
    %1743 = vperm.xlu0 %1742, %v1721
    %v1744 = vpop.permute.xlu0 %1743
    %1747 = vset.pattern.permute.xlu0 0
    %1748 = vperm.xlu0 %1747, %v1722
    %v1749 = vpop.permute.xlu0 %1748
    %1752 = vset.pattern.permute.xlu0 0
    %1753 = vperm.xlu0 %1752, %v1723
    %v1754 = vpop.permute.xlu0 %1753
    %1757 = vset.pattern.permute.xlu0 0
    %1758 = vperm.xlu0 %1757, %v1724
    %v1759 = vpop.permute.xlu0 %1758
    %1762 = vset.pattern.permute.xlu0 0
    %1763 = vperm.xlu0 %1762, %v1725
    %v1764 = vpop.permute.xlu0 %1763
    %1767 = vset.pattern.permute.xlu0 0
    %1768 = vperm.xlu0 %1767, %v1726
    %v1769 = vpop.permute.xlu0 %1768
    %1772 = vset.pattern.permute.xlu0 0
    %1773 = vperm.xlu0 %1772, %v1727
    %v1774 = vpop.permute.xlu0 %1773
    %1777 = vset.pattern.permute.xlu0 0
    %1778 = vperm.xlu0 %1777, %v1728
    %v1779 = vpop.permute.xlu0 %1778
    %1782 = vset.pattern.permute.xlu0 0
    %1783 = vperm.xlu0 %1782, %v1729
    %v1784 = vpop.permute.xlu0 %1783
    %1787 = vset.pattern.permute.xlu0 0
    %1788 = vperm.xlu0 %1787, %v1730
    %v1789 = vpop.permute.xlu0 %1788
    %1792 = vset.pattern.permute.xlu0 0
    %1793 = vperm.xlu0 %1792, %v1731
    %v1794 = vpop.permute.xlu0 %1793
    %1797 = vset.pattern.permute.xlu0 0
    %1798 = vperm.xlu0 %1797, %v1732
    %v1799 = vpop.permute.xlu0 %1798
    %1802 = vset.pattern.permute.xlu0 0
    %1803 = vperm.xlu0 %1802, %v1733
    %v1804 = vpop.permute.xlu0 %1803
    %1807 = vset.pattern.permute.xlu0 0
    %1808 = vperm.xlu0 %1807, %v1734
    %v1809 = vpop.permute.xlu0 %1808
    %1812 = vset.pattern.permute.xlu0 0
    %1813 = vperm.xlu0 %1812, %v1735
    %v1814 = vpop.permute.xlu0 %1813
    %v1816 = vmul.f32 %v1672, %v1739
    %v1817 = vmul.f32 %v1673, %v1739
    %v1818 = vmul.f32 %v1674, %v1739
    %v1819 = vmul.f32 %v1675, %v1744
    %v1820 = vmul.f32 %v1676, %v1744
    %v1821 = vmul.f32 %v1677, %v1744
    %v1822 = vmul.f32 %v1678, %v1749
    %v1823 = vmul.f32 %v1679, %v1749
    %v1824 = vmul.f32 %v1680, %v1749
    %v1825 = vmul.f32 %v1681, %v1754
    %v1826 = vmul.f32 %v1682, %v1754
    %v1827 = vmul.f32 %v1683, %v1754
    %v1828 = vmul.f32 %v1684, %v1759
    %v1829 = vmul.f32 %v1685, %v1759
    %v1830 = vmul.f32 %v1686, %v1759
    %v1831 = vmul.f32 %v1687, %v1764
    %v1832 = vmul.f32 %v1688, %v1764
    %v1833 = vmul.f32 %v1689, %v1764
    %v1834 = vmul.f32 %v1690, %v1769
    %v1835 = vmul.f32 %v1691, %v1769
    %v1836 = vmul.f32 %v1692, %v1769
    %v1837 = vmul.f32 %v1693, %v1774
    %v1838 = vmul.f32 %v1694, %v1774
    %v1839 = vmul.f32 %v1695, %v1774
    %v1840 = vmul.f32 %v1696, %v1779
    %v1841 = vmul.f32 %v1697, %v1779
    %v1842 = vmul.f32 %v1698, %v1779
    %v1843 = vmul.f32 %v1699, %v1784
    %v1844 = vmul.f32 %v1700, %v1784
    %v1845 = vmul.f32 %v1701, %v1784
    %v1846 = vmul.f32 %v1702, %v1789
    %v1847 = vmul.f32 %v1703, %v1789
    %v1848 = vmul.f32 %v1704, %v1789
    %v1849 = vmul.f32 %v1705, %v1794
    %v1850 = vmul.f32 %v1706, %v1794
    %v1851 = vmul.f32 %v1707, %v1794
    %v1852 = vmul.f32 %v1708, %v1799
    %v1853 = vmul.f32 %v1709, %v1799
    %v1854 = vmul.f32 %v1710, %v1799
    %v1855 = vmul.f32 %v1711, %v1804
    %v1856 = vmul.f32 %v1712, %v1804
    %v1857 = vmul.f32 %v1713, %v1804
    %v1858 = vmul.f32 %v1714, %v1809
    %v1859 = vmul.f32 %v1715, %v1809
    %v1860 = vmul.f32 %v1716, %v1809
    %v1861 = vmul.f32 %v1717, %v1814
    %v1862 = vmul.f32 %v1718, %v1814
    %v1863 = vmul.f32 %v1719, %v1814
    %v1864 = vadd.f32 %v1816, %v1819
    %v1865 = vadd.f32 %v1864, %v1822
    %v1866 = vadd.f32 %v1865, %v1825
    %v1867 = vadd.f32 %v1866, %v1828
    %v1868 = vadd.f32 %v1867, %v1831
    %v1869 = vadd.f32 %v1868, %v1834
    %v1870 = vadd.f32 %v1869, %v1837
    %v1871 = vadd.f32 %v1870, %v1840
    %v1872 = vadd.f32 %v1871, %v1843
    %v1873 = vadd.f32 %v1872, %v1846
    %v1874 = vadd.f32 %v1873, %v1849
    %v1875 = vadd.f32 %v1874, %v1852
    %v1876 = vadd.f32 %v1875, %v1855
    %v1877 = vadd.f32 %v1876, %v1858
    %v1878 = vadd.f32 %v1877, %v1861
    %v1879 = vrot.slane %v1878, 4
    %v1880 = vadd.f32 %v1878, %v1879
    %v1881 = vrot.slane %v1880, 2
    %v1882 = vadd.f32 %v1880, %v1881
    %v1883 = vrot.slane %v1882, 1
    %v1884 = vadd.f32 %v1882, %v1883
    %v1885 = vadd.f32 %v1817, %v1820
    %v1886 = vadd.f32 %v1885, %v1823
    %v1887 = vadd.f32 %v1886, %v1826
    %v1888 = vadd.f32 %v1887, %v1829
    %v1889 = vadd.f32 %v1888, %v1832
    %v1890 = vadd.f32 %v1889, %v1835
    %v1891 = vadd.f32 %v1890, %v1838
    %v1892 = vadd.f32 %v1891, %v1841
    %v1893 = vadd.f32 %v1892, %v1844
    %v1894 = vadd.f32 %v1893, %v1847
    %v1895 = vadd.f32 %v1894, %v1850
    %v1896 = vadd.f32 %v1895, %v1853
    %v1897 = vadd.f32 %v1896, %v1856
    %v1898 = vadd.f32 %v1897, %v1859
    %v1899 = vadd.f32 %v1898, %v1862
    %v1900 = vrot.slane %v1899, 4
    %v1901 = vadd.f32 %v1899, %v1900
    %v1902 = vrot.slane %v1901, 2
    %v1903 = vadd.f32 %v1901, %v1902
    %v1904 = vrot.slane %v1903, 1
    %v1905 = vadd.f32 %v1903, %v1904
    %v1906 = vadd.f32 %v1818, %v1821
    %v1907 = vadd.f32 %v1906, %v1824
    %v1908 = vadd.f32 %v1907, %v1827
    %v1909 = vadd.f32 %v1908, %v1830
    %v1910 = vadd.f32 %v1909, %v1833
    %v1911 = vadd.f32 %v1910, %v1836
    %v1912 = vadd.f32 %v1911, %v1839
    %v1913 = vadd.f32 %v1912, %v1842
    %v1914 = vadd.f32 %v1913, %v1845
    %v1915 = vadd.f32 %v1914, %v1848
    %v1916 = vadd.f32 %v1915, %v1851
    %v1917 = vadd.f32 %v1916, %v1854
    %v1918 = vadd.f32 %v1917, %v1857
    %v1919 = vadd.f32 %v1918, %v1860
    %v1920 = vadd.f32 %v1919, %v1863
    %v1921 = vrot.slane %v1920, 4
    %v1922 = vadd.f32 %v1920, %v1921
    %v1923 = vrot.slane %v1922, 2
    %v1924 = vadd.f32 %v1922, %v1923
    %v1925 = vrot.slane %v1924, 1
    %v1926 = vadd.f32 %v1924, %v1925
    %v1927 = vld [vmem:[#allocation2] sm:$0x1]
    %1929 = vset.pattern.permute.xlu0 0
    %1930 = vperm.xlu0 %1929, %v1927
    %v1931 = vpop.permute.xlu0 %1930
    %v1933 = vlaneseq
    %v1934 = vshrl.u32 %v1933, 7
    %v1935 = vsub.s32 0, %v1934
    %v1936 = vrot.slane %v1931, %v1935
    %v1937 = vadd.f32 %v1884, %v1936
    %v1938 = vadd.f32 %v1905, %v1936
    %v1939 = vadd.f32 %v1926, %v1936
    %v1940 = vxor.u32 %v1937, 2147483648
    %v1941 = vxor.u32 %v1938, 2147483648
    %v1942 = vxor.u32 %v1939, 2147483648
    %v1943 = vmul.f32 %v1940, 1.442695
    %v1944 = vpow.pop %v1943
    %v1945 = vmul.f32 %v1941, 1.442695
    %v1946 = vpow.pop %v1945
    %v1947 = vmul.f32 %v1942, 1.442695
    %v1948 = vpow.pop %v1947
    %v1949 = vadd.f32 %v1944, 1.0
    %v1950 = vadd.f32 %v1946, 1.0
    %v1951 = vadd.f32 %v1948, 1.0
    %v1952 = vrcp.pop %v1949
    %v1953 = vmul.f32 1.0, %v1952
    %v1954 = vrcp.pop %v1950
    %v1955 = vmul.f32 1.0, %v1954
    %v1956 = vrcp.pop %v1951
    %v1957 = vmul.f32 1.0, %v1956
    %v1961 = vcombine.low %v1953, %v1955
    %v1963 = vunpack.c.l.s4 1966171168
    %v1964 = vunpack.c.0.s8 %v1963
    %v1965 = vlaneseq
    %v1966 = vshrl.u32 %v1965, 7
    %v1967 = vsub.s32 %v1964, %v1966
    %v1968 = vrot.slane %v1961, %v1967
    %v1970 = vunpack.c.l.s4 1966171168
    %v1971 = vunpack.c.0.s8 %v1970
    %v1972 = vlaneseq
    %v1973 = vshrl.u32 %v1972, 7
    %v1974 = vsub.s32 %v1971, %v1973
    %v1975 = vrot.slane %v1957, %v1974
    %v1976 = vcombine.low %v1968, %v1975
    %v1978 = vunpack.c.l.s4 1966171168
    %v1979 = vunpack.c.0.s8 %v1978
    %v1980 = vlaneseq
    %v1981 = vshrl.u32 %v1980, 7
    %v1982 = vsub.s32 %v1979, %v1981
    %v1983 = vrot.slane %v1976, %v1982
    %v1985 = vlaneseq
    %vm1986 = vcmp.ge.s32.totalorder %v1985, 0
    %vm1987 = vcmp.lt.s32.totalorder %v1985, 384
    %vm1988 = vmand %vm1986, %vm1987
    %1989 = vst.msk [vmem:[#allocation3] sm:$0x7] %vm1988, %v1983
    // Predicated region
    $region30: #{tpu_custom_call.1} parent=1 // pred_check
      _
    $region31: #{tpu_custom_call.1} parent=1 // pred_check_branch
      %1991 = sbr.rel (0) target = $region33
    $region32: #{tpu_custom_call.1} parent=1 // pred_region
      %s1993 = ssub.s32 48, 48
      %1994 = vsyncadd [#allocation4], %s1993
      %s1996 = sshll.u32 [#allocation3], 4
      %s1997 = int_to_ptr.vmem [resolvable:$true] %s1996
      %1999 = dma.vmem_to_hbm [thread:$0]  %s1997, 48, %s7, [#allocation4]
    $region33: #{tpu_custom_call.1} parent=1 // pred_fallthru
      _
    // Predicated region
    $region34: #{tpu_custom_call.1} parent=1 // pred_check
      _
    $region35: #{tpu_custom_call.1} parent=1 // pred_check_branch
      %2001 = sbr.rel (0) target = $region37
    $region36: #{tpu_custom_call.1} parent=1 // pred_region
      %2002 = dma.done [#allocation4], 48
    $region37: #{tpu_custom_call.1} parent=1 // pred_fallthru
      _
    %2003 = vsyncpa [#allocation4], 1

</llo_original>
